<compile_context>
chip_gen: v6e
topology: v6e:2x2x1
jax: 0.10.0
libtpu: 0.0.40
codegen_flags: <defaults>
</compile_context>

<pallas_src>
import math

import jax
import jax.numpy as jnp
from jax.experimental import pallas as pl
from jax.experimental.pallas import tpu as pltpu

LANE = 128  # TPU lane width: pad every feature dim to a multiple of this.


def _round_up(x, m):
    return ((x + m - 1) // m) * m


# ----------------------------------------------------------------------------
# Parameter construction — mirrors Autoencoder.__init__ exactly.
# nn.Linear default init: U(-1/sqrt(in_features), 1/sqrt(in_features)).
# ----------------------------------------------------------------------------
def init_autoencoder_params(key, input_dim, encoding_dims):
    layers = []  # list of (W[out,in], b[out]) in forward order
    n = len(encoding_dims)

    def linear_init(key, in_f, out_f):
        k1, k2 = jax.random.split(key)
        bound = 1.0 / math.sqrt(in_f)
        W = jax.random.uniform(k1, (out_f, in_f), minval=-bound, maxval=bound,
                               dtype=jnp.float32)
        b = jax.random.uniform(k2, (out_f,), minval=-bound, maxval=bound,
                               dtype=jnp.float32)
        return W, b

    # encoder (note the module's quirky indexing: layer 0 reads encoding_dims[-1])
    for i in range(n):
        if i == n // 2:
            in_f, out_f = input_dim, encoding_dims[i]
        else:
            in_f, out_f = encoding_dims[i - 1], encoding_dims[i]
        key, sub = jax.random.split(key)
        layers.append(linear_init(sub, in_f, out_f))
    # decoder
    key, sub = jax.random.split(key)
    layers.append(linear_init(sub, encoding_dims[-1], input_dim))
    return layers


# ----------------------------------------------------------------------------
# Pallas kernel: fused chain of (h @ W + b) -> sigmoid for all layers.
# ----------------------------------------------------------------------------
def _make_kernel(n_layers, compute_dtype):
    def kernel(x_ref, *args):
        # args = (w_0, b_0, w_1, b_1, ..., w_{L-1}, b_{L-1}, out_ref)
        out_ref = args[-1]
        h = x_ref[...].astype(jnp.float32)
        for l in range(n_layers):
            w = args[2 * l][...]          # (in_pad_l, out_pad_l), compute_dtype
            b = args[2 * l + 1][...]      # (1, out_pad_l), f32
            acc = jnp.dot(h.astype(compute_dtype), w,
                          preferred_element_type=jnp.float32) + b
            # sigmoid(x) = 0.5 * (tanh(x/2) + 1)  -> tanh on EUP, mul/add on VALU
            h = 0.5 * (jnp.tanh(0.5 * acc) + 1.0)
        out_ref[...] = h.astype(out_ref.dtype)
    return kernel


def autoencoder_forward(x, layers, *, tm=128, compute_dtype=jnp.float32):
    """x: (B, input_dim) f32. layers: list of (W[out,in], b[out]).

    compute_dtype=jnp.bfloat16 halves weight bytes / doubles MXU rate on
    v6e/v7x (accumulation stays f32); keep f32 on v5e or when matching the
    reference tightly.
    """
    B, input_dim = x.shape
    n_layers = len(layers)

    # Forward dim chain and shape-consistency check (the odd torch __init__
    # is only shape-consistent for certain encoding_dims; enforce like torch).
    dims = [input_dim] + [W.shape[0] for (W, _) in layers]
    for (W, _), d_in in zip(layers, dims[:-1]):
        assert W.shape[1] == d_in, "layer input-dim mismatch (invalid encoding_dims)"
    pdims = [_round_up(d, LANE) for d in dims]

    # ---- lane-pad weights/biases; pre-transpose W to (in, out) -------------
    flat_params = []
    for l, (W, b) in enumerate(layers):
        in_p, out_p = pdims[l], pdims[l + 1]
        Wt = jnp.zeros((in_p, out_p), jnp.float32).at[:W.shape[1], :W.shape[0]].set(
            jnp.asarray(W, jnp.float32).T)
        bp = jnp.zeros((1, out_p), jnp.float32).at[0, :b.shape[0]].set(
            jnp.asarray(b, jnp.float32))
        flat_params.append(Wt.astype(compute_dtype))   # matmul operand
        flat_params.append(bp)                          # bias stays f32
    # TODO(synk): weight BlockSpecs could be single-buffered (pl.Buffered(1))
    # to halve their resident VMEM on v7x; left default-buffered for portability.

    # ---- pad batch so tm divides it -----------------------------------------
    B_pad = _round_up(B, tm)
    x_pad = jnp.zeros((B_pad, pdims[0]), jnp.float32).at[:B, :input_dim].set(
        jnp.asarray(x, jnp.float32))

    # ---- specs ---------------------------------------------------------------
    in_specs = [pl.BlockSpec((tm, pdims[0]), lambda i: (i, 0))]
    for p in flat_params:
        in_specs.append(pl.BlockSpec(p.shape, lambda i: (0, 0)))  # VMEM-resident
    out_spec = pl.BlockSpec((tm, pdims[-1]), lambda i: (i, 0))

    # ---- cost estimate -------------------------------------------------------
    flops = 2 * B_pad * sum(pdims[l] * pdims[l + 1] for l in range(n_layers))
    transcendentals = B_pad * sum(pdims[1:])
    param_bytes = sum(int(p.size) * p.dtype.itemsize for p in flat_params)
    bytes_accessed = 4 * B_pad * (pdims[0] + pdims[-1]) + param_bytes
    cost = pl.CostEstimate(flops=flops, transcendentals=transcendentals,
                           bytes_accessed=bytes_accessed)

    # ---- VMEM budget (double-buffered x/out + resident params + live h) -----
    max_w = max(pdims)
    needed = (2 * tm * pdims[0] * 4 + 2 * tm * pdims[-1] * 4
              + 2 * param_bytes + 2 * tm * max_w * 4)
    vmem_limit = int(min(max(int(needed * 1.5), 32 << 20), 56 << 20))

    out_pad = pl.pallas_call(
        _make_kernel(n_layers, compute_dtype),
        out_shape=jax.ShapeDtypeStruct((B_pad, pdims[-1]), jnp.float32),
        grid_spec=pltpu.PrefetchScalarGridSpec(
            num_scalar_prefetch=0,
            grid=(B_pad // tm,),
            in_specs=in_specs,
            out_specs=out_spec,
        ),
        compiler_params=pltpu.CompilerParams(
            dimension_semantics=("parallel",),
            vmem_limit_bytes=vmem_limit),
        cost_estimate=cost,
    )(x_pad, *flat_params)

    # strip batch + lane padding
    return out_pad[:B, :dims[-1]]


# ----------------------------------------------------------------------------
# Pure-JAX reference (mirrors PyTorch forward) for correctness check.
# ----------------------------------------------------------------------------
def reference_forward(x, layers):
    h = x
    for (W, b) in layers:
        h = jax.nn.sigmoid(
            jnp.dot(h, W.T, precision=jax.lax.Precision.HIGHEST) + b)
    return h


if __name__ == "__main__":
    # Shapes kept small but chosen so the grid has >= 2 even steps (feeds both
    # v7x TensorCores) and tm=128 keeps the MXU M-dim full. Note: the odd
    # __init__ loop of the PyTorch module only yields a shape-consistent
    # forward when encoding_dims[-1] == input_dim and the chain closes; we
    # pick such a configuration.
    input_dim = 64
    encoding_dims = (64, 32, 64)
    batch = 256
    tm = 128   # grid = (2,) — even, both TCs busy on v7x; full MXU rows.

    key = jax.random.PRNGKey(0)
    key, kx, kp = jax.random.split(key, 3)
    x = jax.random.normal(kx, (batch, input_dim), dtype=jnp.float32)
    layers = init_autoencoder_params(kp, input_dim, encoding_dims)

    out = autoencoder_forward(x, layers, tm=tm, compute_dtype=jnp.float32)
    out = jax.block_until_ready(out)

    ref = reference_forward(x, layers)
    assert out.shape == (batch, input_dim)
    # Tolerance absorbs MXU bf16-pass rounding differences between the fused
    # kernel and the XLA reference; outputs are in (0,1) so 2e-3 is tight
    # enough to catch any real bug (wrong layer, missing bias, bad padding).
    assert jnp.allclose(out, ref, atol=2e-3, rtol=2e-3), "mismatch vs reference"

    print("KERNEL_OK")
</pallas_src>

<mosaic_0001>
module attributes {stable_mosaic.version = 11 : i64} {
  func.func @kernel(%arg0: i32, %arg1: memref<128x128xf32, #tpu.memory_space<vmem>>, %arg2: memref<128x128xf32, #tpu.memory_space<vmem>>, %arg3: memref<1x128xf32, #tpu.memory_space<vmem>>, %arg4: memref<128x128xf32, #tpu.memory_space<vmem>>, %arg5: memref<1x128xf32, #tpu.memory_space<vmem>>, %arg6: memref<128x128xf32, #tpu.memory_space<vmem>>, %arg7: memref<1x128xf32, #tpu.memory_space<vmem>>, %arg8: memref<128x128xf32, #tpu.memory_space<vmem>>, %arg9: memref<1x128xf32, #tpu.memory_space<vmem>>, %arg10: memref<128x128xf32, #tpu.memory_space<vmem>>) attributes {dimension_semantics = [#tpu.dimension_semantics<parallel>], iteration_bounds = array<i64: 2>, scalar_prefetch = 0 : i64, scratch_operands = 0 : i64, tpu.core_type = #tpu.core_type<tc>, window_params = [{transform_indices = @transform_0, window_bounds = array<i64: 128, 128>}, {pipeline_mode = #tpu.pipeline_mode<synchronous>, transform_indices = @transform_1, window_bounds = array<i64: 128, 128>}, {pipeline_mode = #tpu.pipeline_mode<synchronous>, transform_indices = @transform_2, window_bounds = array<i64: 1, 128>}, {pipeline_mode = #tpu.pipeline_mode<synchronous>, transform_indices = @transform_3, window_bounds = array<i64: 128, 128>}, {pipeline_mode = #tpu.pipeline_mode<synchronous>, transform_indices = @transform_4, window_bounds = array<i64: 1, 128>}, {pipeline_mode = #tpu.pipeline_mode<synchronous>, transform_indices = @transform_5, window_bounds = array<i64: 128, 128>}, {pipeline_mode = #tpu.pipeline_mode<synchronous>, transform_indices = @transform_6, window_bounds = array<i64: 1, 128>}, {pipeline_mode = #tpu.pipeline_mode<synchronous>, transform_indices = @transform_7, window_bounds = array<i64: 128, 128>}, {pipeline_mode = #tpu.pipeline_mode<synchronous>, transform_indices = @transform_8, window_bounds = array<i64: 1, 128>}, {transform_indices = @transform_9, window_bounds = array<i64: 128, 128>}]} {
    %c0 = arith.constant 0 : index
    %c0_0 = arith.constant 0 : index
    %0 = vector.load %arg1[%c0, %c0_0] : memref<128x128xf32, #tpu.memory_space<vmem>>, vector<128x128xf32>
    %c0_1 = arith.constant 0 : index
    %c0_2 = arith.constant 0 : index
    %1 = vector.load %arg2[%c0_1, %c0_2] : memref<128x128xf32, #tpu.memory_space<vmem>>, vector<128x128xf32>
    %c0_3 = arith.constant 0 : index
    %c0_4 = arith.constant 0 : index
    %2 = vector.load %arg3[%c0_3, %c0_4] : memref<1x128xf32, #tpu.memory_space<vmem>>, vector<1x128xf32>
    %cst = arith.constant dense<0.000000e+00> : vector<128x128xf32>
    %3 = tpu.matmul %0, %1, %cst {dimension_numbers = #tpu.dot_dimension_numbers<[1], [0], [0], [1], [0, 0, 1, 1], [], []>} : vector<128x128xf32>, vector<128x128xf32>, vector<128x128xf32> -> vector<128x128xf32>
    %4 = vector.broadcast %2 : vector<1x128xf32> to vector<128x128xf32>
    %5 = arith.addf %3, %4 : vector<128x128xf32>
    %cst_5 = arith.constant 5.000000e-01 : f32
    %6 = vector.broadcast %cst_5 : f32 to vector<128x128xf32>
    %7 = arith.mulf %6, %5 : vector<128x128xf32>
    %8 = math.tanh %7 : vector<128x128xf32>
    %cst_6 = arith.constant 1.000000e+00 : f32
    %9 = vector.broadcast %cst_6 : f32 to vector<128x128xf32>
    %10 = arith.addf %8, %9 : vector<128x128xf32>
    %cst_7 = arith.constant 5.000000e-01 : f32
    %11 = vector.broadcast %cst_7 : f32 to vector<128x128xf32>
    %12 = arith.mulf %11, %10 : vector<128x128xf32>
    %c0_8 = arith.constant 0 : index
    %c0_9 = arith.constant 0 : index
    %13 = vector.load %arg4[%c0_8, %c0_9] : memref<128x128xf32, #tpu.memory_space<vmem>>, vector<128x128xf32>
    %c0_10 = arith.constant 0 : index
    %c0_11 = arith.constant 0 : index
    %14 = vector.load %arg5[%c0_10, %c0_11] : memref<1x128xf32, #tpu.memory_space<vmem>>, vector<1x128xf32>
    %cst_12 = arith.constant dense<0.000000e+00> : vector<128x128xf32>
    %15 = tpu.matmul %12, %13, %cst_12 {dimension_numbers = #tpu.dot_dimension_numbers<[1], [0], [0], [1], [0, 0, 1, 1], [], []>} : vector<128x128xf32>, vector<128x128xf32>, vector<128x128xf32> -> vector<128x128xf32>
    %16 = vector.broadcast %14 : vector<1x128xf32> to vector<128x128xf32>
    %17 = arith.addf %15, %16 : vector<128x128xf32>
    %cst_13 = arith.constant 5.000000e-01 : f32
    %18 = vector.broadcast %cst_13 : f32 to vector<128x128xf32>
    %19 = arith.mulf %18, %17 : vector<128x128xf32>
    %20 = math.tanh %19 : vector<128x128xf32>
    %cst_14 = arith.constant 1.000000e+00 : f32
    %21 = vector.broadcast %cst_14 : f32 to vector<128x128xf32>
    %22 = arith.addf %20, %21 : vector<128x128xf32>
    %cst_15 = arith.constant 5.000000e-01 : f32
    %23 = vector.broadcast %cst_15 : f32 to vector<128x128xf32>
    %24 = arith.mulf %23, %22 : vector<128x128xf32>
    %c0_16 = arith.constant 0 : index
    %c0_17 = arith.constant 0 : index
    %25 = vector.load %arg6[%c0_16, %c0_17] : memref<128x128xf32, #tpu.memory_space<vmem>>, vector<128x128xf32>
    %c0_18 = arith.constant 0 : index
    %c0_19 = arith.constant 0 : index
    %26 = vector.load %arg7[%c0_18, %c0_19] : memref<1x128xf32, #tpu.memory_space<vmem>>, vector<1x128xf32>
    %cst_20 = arith.constant dense<0.000000e+00> : vector<128x128xf32>
    %27 = tpu.matmul %24, %25, %cst_20 {dimension_numbers = #tpu.dot_dimension_numbers<[1], [0], [0], [1], [0, 0, 1, 1], [], []>} : vector<128x128xf32>, vector<128x128xf32>, vector<128x128xf32> -> vector<128x128xf32>
    %28 = vector.broadcast %26 : vector<1x128xf32> to vector<128x128xf32>
    %29 = arith.addf %27, %28 : vector<128x128xf32>
    %cst_21 = arith.constant 5.000000e-01 : f32
    %30 = vector.broadcast %cst_21 : f32 to vector<128x128xf32>
    %31 = arith.mulf %30, %29 : vector<128x128xf32>
    %32 = math.tanh %31 : vector<128x128xf32>
    %cst_22 = arith.constant 1.000000e+00 : f32
    %33 = vector.broadcast %cst_22 : f32 to vector<128x128xf32>
    %34 = arith.addf %32, %33 : vector<128x128xf32>
    %cst_23 = arith.constant 5.000000e-01 : f32
    %35 = vector.broadcast %cst_23 : f32 to vector<128x128xf32>
    %36 = arith.mulf %35, %34 : vector<128x128xf32>
    %c0_24 = arith.constant 0 : index
    %c0_25 = arith.constant 0 : index
    %37 = vector.load %arg8[%c0_24, %c0_25] : memref<128x128xf32, #tpu.memory_space<vmem>>, vector<128x128xf32>
    %c0_26 = arith.constant 0 : index
    %c0_27 = arith.constant 0 : index
    %38 = vector.load %arg9[%c0_26, %c0_27] : memref<1x128xf32, #tpu.memory_space<vmem>>, vector<1x128xf32>
    %cst_28 = arith.constant dense<0.000000e+00> : vector<128x128xf32>
    %39 = tpu.matmul %36, %37, %cst_28 {dimension_numbers = #tpu.dot_dimension_numbers<[1], [0], [0], [1], [0, 0, 1, 1], [], []>} : vector<128x128xf32>, vector<128x128xf32>, vector<128x128xf32> -> vector<128x128xf32>
    %40 = vector.broadcast %38 : vector<1x128xf32> to vector<128x128xf32>
    %41 = arith.addf %39, %40 : vector<128x128xf32>
    %cst_29 = arith.constant 5.000000e-01 : f32
    %42 = vector.broadcast %cst_29 : f32 to vector<128x128xf32>
    %43 = arith.mulf %42, %41 : vector<128x128xf32>
    %44 = math.tanh %43 : vector<128x128xf32>
    %cst_30 = arith.constant 1.000000e+00 : f32
    %45 = vector.broadcast %cst_30 : f32 to vector<128x128xf32>
    %46 = arith.addf %44, %45 : vector<128x128xf32>
    %cst_31 = arith.constant 5.000000e-01 : f32
    %47 = vector.broadcast %cst_31 : f32 to vector<128x128xf32>
    %48 = arith.mulf %47, %46 : vector<128x128xf32>
    %c0_32 = arith.constant 0 : index
    %c0_33 = arith.constant 0 : index
    %49 = vector.load %arg10[%c0_32, %c0_33] : memref<128x128xf32, #tpu.memory_space<vmem>>, vector<128x128xf32>
    tpu.vector_store %arg10[%c0_32, %c0_33], %48 {strides = array<i32>} : memref<128x128xf32, #tpu.memory_space<vmem>>, vector<128x128xf32>,
    return
  }
  func.func @transform_0(%arg0: i32) -> (i32, i32) {
    %c0_i32 = arith.constant 0 : i32
    %c0_i32_0 = arith.constant 0 : i32
    return %arg0, %c0_i32 : i32, i32
  }
  func.func @transform_1(%arg0: i32) -> (i32, i32) {
    %c0_i32 = arith.constant 0 : i32
    %c0_i32_0 = arith.constant 0 : i32
    %c0_i32_1 = arith.constant 0 : i32
    return %c0_i32, %c0_i32_0 : i32, i32
  }
  func.func @transform_2(%arg0: i32) -> (i32, i32) {
    %c0_i32 = arith.constant 0 : i32
    %c0_i32_0 = arith.constant 0 : i32
    %c0_i32_1 = arith.constant 0 : i32
    return %c0_i32, %c0_i32_0 : i32, i32
  }
  func.func @transform_3(%arg0: i32) -> (i32, i32) {
    %c0_i32 = arith.constant 0 : i32
    %c0_i32_0 = arith.constant 0 : i32
    %c0_i32_1 = arith.constant 0 : i32
    return %c0_i32, %c0_i32_0 : i32, i32
  }
  func.func @transform_4(%arg0: i32) -> (i32, i32) {
    %c0_i32 = arith.constant 0 : i32
    %c0_i32_0 = arith.constant 0 : i32
    %c0_i32_1 = arith.constant 0 : i32
    return %c0_i32, %c0_i32_0 : i32, i32
  }
  func.func @transform_5(%arg0: i32) -> (i32, i32) {
    %c0_i32 = arith.constant 0 : i32
    %c0_i32_0 = arith.constant 0 : i32
    %c0_i32_1 = arith.constant 0 : i32
    return %c0_i32, %c0_i32_0 : i32, i32
  }
  func.func @transform_6(%arg0: i32) -> (i32, i32) {
    %c0_i32 = arith.constant 0 : i32
    %c0_i32_0 = arith.constant 0 : i32
    %c0_i32_1 = arith.constant 0 : i32
    return %c0_i32, %c0_i32_0 : i32, i32
  }
  func.func @transform_7(%arg0: i32) -> (i32, i32) {
    %c0_i32 = arith.constant 0 : i32
    %c0_i32_0 = arith.constant 0 : i32
    %c0_i32_1 = arith.constant 0 : i32
    return %c0_i32, %c0_i32_0 : i32, i32
  }
  func.func @transform_8(%arg0: i32) -> (i32, i32) {
    %c0_i32 = arith.constant 0 : i32
    %c0_i32_0 = arith.constant 0 : i32
    %c0_i32_1 = arith.constant 0 : i32
    return %c0_i32, %c0_i32_0 : i32, i32
  }
  func.func @transform_9(%arg0: i32) -> (i32, i32) {
    %c0_i32 = arith.constant 0 : i32
    %c0_i32_0 = arith.constant 0 : i32
    return %arg0, %c0_i32 : i32, i32
  }
}

</mosaic_0001>

<llo_original>
// kernel: tpu_custom_call.1
$region0: #{tpu_custom_call.1}
  #allocation0 [shape = 'u32[]', space=smem, size = 0x4, offset = 0x4, fixed_abs, tag = 'smem constant byte address 0x4 - core index']
  #allocation1 [shape = 'u32[144,128]{1,0:T(1,128)}', space=vmem, size = 0x12000, scoped, tag = 'internal scratch']
  %s0 = inlined_call_operand.hbm [shape: f32[256,128], index: 0, kind: input, shape index: {}]
  %s1 = inlined_call_operand.hbm [shape: f32[128,128], index: 1, kind: input, shape index: {}]
  %s2 = inlined_call_operand.vmem [shape: f32[1,128], index: 2, kind: input, shape index: {}]
  %s3 = inlined_call_operand.hbm [shape: f32[128,128], index: 3, kind: input, shape index: {}]
  %s4 = inlined_call_operand.vmem [shape: f32[1,128], index: 4, kind: input, shape index: {}]
  %s5 = inlined_call_operand.hbm [shape: f32[128,128], index: 5, kind: input, shape index: {}]
  %s6 = inlined_call_operand.vmem [shape: f32[1,128], index: 6, kind: input, shape index: {}]
  %s7 = inlined_call_operand.hbm [shape: f32[128,128], index: 7, kind: input, shape index: {}]
  %s8 = inlined_call_operand.vmem [shape: f32[1,128], index: 8, kind: input, shape index: {}]
  %s9 = inlined_call_operand.hbm [shape: f32[256,128], index: 9, kind: output, shape index: {}]
  %s10 = sld [smem:[#allocation0]]
  $region89: #{tpu_custom_call.1} parent=0
    _
  %s12 = ssub.s32 1, %s10
  %s13 = scalar_select 0, %s12, %s10
  $region1: #{tpu_custom_call.1} parent=0
    #allocation2 [shape = 'u8[131072]{0}', space=vmem, size = 0x20000, scoped, tag = 'input window, operand 0']
    #allocation3 [shape = 's32[2]{0}', space=sflag, size = 0x8, scoped, tag = 'scoped memory for tpu_custom_call.1']
    #allocation4 [shape = 's32[2]{0}', space=sflag, size = 0x8, scoped, tag = 'scoped memory for tpu_custom_call.1']
    #allocation5 [shape = 'u8[65536]{0}', space=vmem, size = 0x10000, scoped, tag = 'input window, operand 1, single buffered']
    #allocation6 [shape = 's32[1]{0}', space=sflag, size = 0x4, scoped, tag = 'scoped memory for tpu_custom_call.1']
    #allocation7 [shape = 'u8[65536]{0}', space=vmem, size = 0x10000, scoped, tag = 'input window, operand 3, single buffered']
    #allocation8 [shape = 'u8[65536]{0}', space=vmem, size = 0x10000, scoped, tag = 'input window, operand 5, single buffered']
    #allocation9 [shape = 's32[1]{0}', space=sflag, size = 0x4, scoped, tag = 'scoped memory for tpu_custom_call.1']
    #allocation10 [shape = 'u8[65536]{0}', space=vmem, size = 0x10000, scoped, tag = 'input window, operand 7, single buffered']
    #allocation11 [shape = 'u8[131072]{0}', space=vmem, size = 0x20000, scoped, tag = 'output window, operand 0']
    %14 = vsyncpa [#allocation3], 0
    %s15 = scalar_lea.sflag [#allocation3], 1
    %16 = vsyncpa %s15, 0
    %17 = vsyncpa [#allocation6], 0
    %18 = vsyncpa [#allocation9], 0
    %19 = vsyncpa [#allocation4], 0
    %s20 = scalar_lea.sflag [#allocation4], 1
    %21 = vsyncpa %s20, 0
    loop: start=0, step=1, limit=4
    $region2: #{tpu_custom_call.1} parent=1 // loop_pre_header
      _
    $region3: #{tpu_custom_call.1} parent=1 // loop_header
      %s23 = sphi 0, %s27
      %p24 = scmp.ge.s32.totalorder %s23, 4
      %s33 = sphi 0, %s35
      %s36 = sphi 0, %s33
      %s37 = sphi 0, %s36
      %s53 = sphi 0, %s37
      %s57 = sphi 0, %s57
      %s59 = sphi 0, %s57
      %s60 = sphi 0, %s59
      %s74 = sphi 0, %s60
      %s78 = sphi 0, %s78
      %s80 = sphi 0, %s78
      %s81 = sphi 0, %s80
      %s95 = sphi 0, %s81
      %s99 = sphi 0, %s99
      %s101 = sphi 0, %s99
      %s102 = sphi 0, %s101
      %s116 = sphi 0, %s102
      %s120 = sphi 0, %s120
      %s122 = sphi 0, %s120
      %s123 = sphi 0, %s122
      %s137 = sphi 0, %s123
      %s141 = sphi 0, %s141
      %s143 = sphi 0, %s141
      %s144 = sphi 0, %s143
      %s158 = sphi 0, %s144
      %s162 = sphi 0, %s162
      %s164 = sphi 0, %s162
      %s165 = sphi 0, %s164
      %s179 = sphi 0, %s165
      %s183 = sphi 0, %s183
      %s185 = sphi 0, %s183
      %s186 = sphi 0, %s185
      %s200 = sphi 0, %s186
      %s204 = sphi 0, %s204
      %s206 = sphi 0, %s204
      %s207 = sphi 0, %s206
      %s221 = sphi 0, %s207
      %s227 = sphi 0, %s229
      %s230 = sphi 0, %s227
      %s231 = sphi 0, %s230
      %s247 = sphi 0, %s231
    $region4: #{tpu_custom_call.1} parent=1 // loop_header_branch
      %26 = sbr.rel (%p24) target = $region8
    $region5: #{tpu_custom_call.1} parent=1 // loop_body
      %s28 = ssub.s32 %s23, 1
      %s29 = ssub.s32 %s23, 2
      %s30 = sadd.s32 %s23, 1
      %s31 = ssub.s32 %s23, %s30
      %p32 = scmp.eq.s32.totalorder %s31, 0
      %s34 = sadd.s32 %s33, 1
      %s35 = scalar_select %p32, %s33, %s34
      %p38 = pneg %p32
      %p39 = scmp.eq.s32.totalorder %s23, 1
      %p40 = por %p38, %p39
      %p41 = scmp.ne.s32.totalorder %s33, %s36
      %p42 = scmp.eq.s32.totalorder %s23, 0
      %p43 = por %p41, %p42
      %p44 = scmp.ne.s32.totalorder %s33, %s36
      %p45 = scmp.eq.s32.totalorder %s28, 1
      %p46 = por %p44, %p45
      %p47 = scmp.ne.s32.totalorder %s36, %s37
      %p48 = scmp.eq.s32.totalorder %s28, 0
      %p49 = por %p47, %p48
      %p50 = scmp.ne.s32.totalorder %s36, %s37
      %p51 = scmp.eq.s32.totalorder %s29, 1
      %p52 = por %p50, %p51
      %p54 = scmp.ne.s32.totalorder %s37, %s53
      %p55 = scmp.eq.s32.totalorder %s29, 0
      %p56 = por %p54, %p55
      %s58 = sadd.s32 %s57, 1
      %p61 = scmp.eq.s32.totalorder %s23, 1
      %p62 = scmp.ne.s32.totalorder %s57, %s59
      %p63 = scmp.eq.s32.totalorder %s23, 0
      %p64 = por %p62, %p63
      %p65 = scmp.ne.s32.totalorder %s57, %s59
      %p66 = scmp.eq.s32.totalorder %s28, 1
      %p67 = por %p65, %p66
      %p68 = scmp.ne.s32.totalorder %s59, %s60
      %p69 = scmp.eq.s32.totalorder %s28, 0
      %p70 = por %p68, %p69
      %p71 = scmp.ne.s32.totalorder %s59, %s60
      %p72 = scmp.eq.s32.totalorder %s29, 1
      %p73 = por %p71, %p72
      %p75 = scmp.ne.s32.totalorder %s60, %s74
      %p76 = scmp.eq.s32.totalorder %s29, 0
      %p77 = por %p75, %p76
      %s79 = sadd.s32 %s78, 1
      %p82 = scmp.eq.s32.totalorder %s23, 1
      %p83 = scmp.ne.s32.totalorder %s78, %s80
      %p84 = scmp.eq.s32.totalorder %s23, 0
      %p85 = por %p83, %p84
      %p86 = scmp.ne.s32.totalorder %s78, %s80
      %p87 = scmp.eq.s32.totalorder %s28, 1
      %p88 = por %p86, %p87
      %p89 = scmp.ne.s32.totalorder %s80, %s81
      %p90 = scmp.eq.s32.totalorder %s28, 0
      %p91 = por %p89, %p90
      %p92 = scmp.ne.s32.totalorder %s80, %s81
      %p93 = scmp.eq.s32.totalorder %s29, 1
      %p94 = por %p92, %p93
      %p96 = scmp.ne.s32.totalorder %s81, %s95
      %p97 = scmp.eq.s32.totalorder %s29, 0
      %p98 = por %p96, %p97
      %s100 = sadd.s32 %s99, 1
      %p103 = scmp.eq.s32.totalorder %s23, 1
      %p104 = scmp.ne.s32.totalorder %s99, %s101
      %p105 = scmp.eq.s32.totalorder %s23, 0
      %p106 = por %p104, %p105
      %p107 = scmp.ne.s32.totalorder %s99, %s101
      %p108 = scmp.eq.s32.totalorder %s28, 1
      %p109 = por %p107, %p108
      %p110 = scmp.ne.s32.totalorder %s101, %s102
      %p111 = scmp.eq.s32.totalorder %s28, 0
      %p112 = por %p110, %p111
      %p113 = scmp.ne.s32.totalorder %s101, %s102
      %p114 = scmp.eq.s32.totalorder %s29, 1
      %p115 = por %p113, %p114
      %p117 = scmp.ne.s32.totalorder %s102, %s116
      %p118 = scmp.eq.s32.totalorder %s29, 0
      %p119 = por %p117, %p118
      %s121 = sadd.s32 %s120, 1
      %p124 = scmp.eq.s32.totalorder %s23, 1
      %p125 = scmp.ne.s32.totalorder %s120, %s122
      %p126 = scmp.eq.s32.totalorder %s23, 0
      %p127 = por %p125, %p126
      %p128 = scmp.ne.s32.totalorder %s120, %s122
      %p129 = scmp.eq.s32.totalorder %s28, 1
      %p130 = por %p128, %p129
      %p131 = scmp.ne.s32.totalorder %s122, %s123
      %p132 = scmp.eq.s32.totalorder %s28, 0
      %p133 = por %p131, %p132
      %p134 = scmp.ne.s32.totalorder %s122, %s123
      %p135 = scmp.eq.s32.totalorder %s29, 1
      %p136 = por %p134, %p135
      %p138 = scmp.ne.s32.totalorder %s123, %s137
      %p139 = scmp.eq.s32.totalorder %s29, 0
      %p140 = por %p138, %p139
      %s142 = sadd.s32 %s141, 1
      %p145 = scmp.eq.s32.totalorder %s23, 1
      %p146 = scmp.ne.s32.totalorder %s141, %s143
      %p147 = scmp.eq.s32.totalorder %s23, 0
      %p148 = por %p146, %p147
      %p149 = scmp.ne.s32.totalorder %s141, %s143
      %p150 = scmp.eq.s32.totalorder %s28, 1
      %p151 = por %p149, %p150
      %p152 = scmp.ne.s32.totalorder %s143, %s144
      %p153 = scmp.eq.s32.totalorder %s28, 0
      %p154 = por %p152, %p153
      %p155 = scmp.ne.s32.totalorder %s143, %s144
      %p156 = scmp.eq.s32.totalorder %s29, 1
      %p157 = por %p155, %p156
      %p159 = scmp.ne.s32.totalorder %s144, %s158
      %p160 = scmp.eq.s32.totalorder %s29, 0
      %p161 = por %p159, %p160
      %s163 = sadd.s32 %s162, 1
      %p166 = scmp.eq.s32.totalorder %s23, 1
      %p167 = scmp.ne.s32.totalorder %s162, %s164
      %p168 = scmp.eq.s32.totalorder %s23, 0
      %p169 = por %p167, %p168
      %p170 = scmp.ne.s32.totalorder %s162, %s164
      %p171 = scmp.eq.s32.totalorder %s28, 1
      %p172 = por %p170, %p171
      %p173 = scmp.ne.s32.totalorder %s164, %s165
      %p174 = scmp.eq.s32.totalorder %s28, 0
      %p175 = por %p173, %p174
      %p176 = scmp.ne.s32.totalorder %s164, %s165
      %p177 = scmp.eq.s32.totalorder %s29, 1
      %p178 = por %p176, %p177
      %p180 = scmp.ne.s32.totalorder %s165, %s179
      %p181 = scmp.eq.s32.totalorder %s29, 0
      %p182 = por %p180, %p181
      %s184 = sadd.s32 %s183, 1
      %p187 = scmp.eq.s32.totalorder %s23, 1
      %p188 = scmp.ne.s32.totalorder %s183, %s185
      %p189 = scmp.eq.s32.totalorder %s23, 0
      %p190 = por %p188, %p189
      %p191 = scmp.ne.s32.totalorder %s183, %s185
      %p192 = scmp.eq.s32.totalorder %s28, 1
      %p193 = por %p191, %p192
      %p194 = scmp.ne.s32.totalorder %s185, %s186
      %p195 = scmp.eq.s32.totalorder %s28, 0
      %p196 = por %p194, %p195
      %p197 = scmp.ne.s32.totalorder %s185, %s186
      %p198 = scmp.eq.s32.totalorder %s29, 1
      %p199 = por %p197, %p198
      %p201 = scmp.ne.s32.totalorder %s186, %s200
      %p202 = scmp.eq.s32.totalorder %s29, 0
      %p203 = por %p201, %p202
      %s205 = sadd.s32 %s204, 1
      %p208 = scmp.eq.s32.totalorder %s23, 1
      %p209 = scmp.ne.s32.totalorder %s204, %s206
      %p210 = scmp.eq.s32.totalorder %s23, 0
      %p211 = por %p209, %p210
      %p212 = scmp.ne.s32.totalorder %s204, %s206
      %p213 = scmp.eq.s32.totalorder %s28, 1
      %p214 = por %p212, %p213
      %p215 = scmp.ne.s32.totalorder %s206, %s207
      %p216 = scmp.eq.s32.totalorder %s28, 0
      %p217 = por %p215, %p216
      %p218 = scmp.ne.s32.totalorder %s206, %s207
      %p219 = scmp.eq.s32.totalorder %s29, 1
      %p220 = por %p218, %p219
      %p222 = scmp.ne.s32.totalorder %s207, %s221
      %p223 = scmp.eq.s32.totalorder %s29, 0
      %p224 = por %p222, %p223
      %s225 = ssub.s32 %s23, %s30
      %p226 = scmp.eq.s32.totalorder %s225, 0
      %s228 = sadd.s32 %s227, 1
      %s229 = scalar_select %p226, %s227, %s228
      %p232 = pneg %p226
      %p233 = scmp.eq.s32.totalorder %s23, 1
      %p234 = por %p232, %p233
      %p235 = scmp.ne.s32.totalorder %s227, %s230
      %p236 = scmp.eq.s32.totalorder %s23, 0
      %p237 = por %p235, %p236
      %p238 = scmp.ne.s32.totalorder %s227, %s230
      %p239 = scmp.eq.s32.totalorder %s28, 1
      %p240 = por %p238, %p239
      %p241 = scmp.ne.s32.totalorder %s230, %s231
      %p242 = scmp.eq.s32.totalorder %s28, 0
      %p243 = por %p241, %p242
      %p244 = scmp.ne.s32.totalorder %s230, %s231
      %p245 = scmp.eq.s32.totalorder %s29, 1
      %p246 = por %p244, %p245
      %p248 = scmp.ne.s32.totalorder %s231, %s247
      %p249 = scmp.eq.s32.totalorder %s29, 0
      %p250 = por %p248, %p249
      %p251 = scmp.le.s32.totalorder 1, %s23
      %p252 = scmp.lt.s32.totalorder %s23, 3
      %p253 = pnand %p251, %p252
      %p254 = pneg %p253
      // Predicated region
      $region9: #{tpu_custom_call.1} parent=5 // pred_check
        _
      $region10: #{tpu_custom_call.1} parent=5 // pred_check_branch
        %256 = sbr.rel (%p253) target = $region12
      $region11: #{tpu_custom_call.1} parent=5 // pred_region
        %s257 = ssub.s32 %s23, 1
        // Predicated region
        $region13: #{tpu_custom_call.1} parent=11 // pred_check
          %p258 = pneg %p70
        $region14: #{tpu_custom_call.1} parent=11 // pred_check_branch
          %260 = sbr.rel (%p258) target = $region16
        $region15: #{tpu_custom_call.1} parent=11 // pred_region
          %s262 = ssub.s32 2048, 2048
          %263 = vsyncadd [#allocation6], %s262
          %s264 = sshll.u32 [#allocation5], 4
          %s265 = int_to_ptr.vmem [resolvable:$true] %s264
          %270 = dma.hbm_to_vmem [thread:$0]  %s1, 2048, %s265, [#allocation6], 128, 128, 8
        $region16: #{tpu_custom_call.1} parent=11 // pred_fallthru
          _
        // Predicated region
        $region17: #{tpu_custom_call.1} parent=11 // pred_check
          %p271 = pneg %p91
        $region18: #{tpu_custom_call.1} parent=11 // pred_check_branch
          %273 = sbr.rel (%p271) target = $region20
        $region19: #{tpu_custom_call.1} parent=11 // pred_region
          _
        $region20: #{tpu_custom_call.1} parent=11 // pred_fallthru
          _
        // Predicated region
        $region21: #{tpu_custom_call.1} parent=11 // pred_check
          %p274 = pneg %p112
        $region22: #{tpu_custom_call.1} parent=11 // pred_check_branch
          %276 = sbr.rel (%p274) target = $region24
        $region23: #{tpu_custom_call.1} parent=11 // pred_region
          %s278 = ssub.s32 2048, 2048
          %279 = vsyncadd [#allocation6], %s278
          %s280 = sshll.u32 [#allocation7], 4
          %s281 = int_to_ptr.vmem [resolvable:$true] %s280
          %286 = dma.hbm_to_vmem [thread:$0]  %s3, 2048, %s281, [#allocation6], 128, 128, 8
        $region24: #{tpu_custom_call.1} parent=11 // pred_fallthru
          _
        // Predicated region
        $region25: #{tpu_custom_call.1} parent=11 // pred_check
          %p287 = pneg %p133
        $region26: #{tpu_custom_call.1} parent=11 // pred_check_branch
          %289 = sbr.rel (%p287) target = $region28
        $region27: #{tpu_custom_call.1} parent=11 // pred_region
          _
        $region28: #{tpu_custom_call.1} parent=11 // pred_fallthru
          _
        // Predicated region
        $region29: #{tpu_custom_call.1} parent=11 // pred_check
          %p290 = pneg %p154
        $region30: #{tpu_custom_call.1} parent=11 // pred_check_branch
          %292 = sbr.rel (%p290) target = $region32
        $region31: #{tpu_custom_call.1} parent=11 // pred_region
          %s294 = ssub.s32 2048, 2048
          %295 = vsyncadd [#allocation9], %s294
          %s296 = sshll.u32 [#allocation8], 4
          %s297 = int_to_ptr.vmem [resolvable:$true] %s296
          %302 = dma.hbm_to_vmem [thread:$0]  %s5, 2048, %s297, [#allocation9], 128, 128, 8
        $region32: #{tpu_custom_call.1} parent=11 // pred_fallthru
          _
        // Predicated region
        $region33: #{tpu_custom_call.1} parent=11 // pred_check
          %p303 = pneg %p175
        $region34: #{tpu_custom_call.1} parent=11 // pred_check_branch
          %305 = sbr.rel (%p303) target = $region36
        $region35: #{tpu_custom_call.1} parent=11 // pred_region
          _
        $region36: #{tpu_custom_call.1} parent=11 // pred_fallthru
          _
        // Predicated region
        $region37: #{tpu_custom_call.1} parent=11 // pred_check
          %p306 = pneg %p196
        $region38: #{tpu_custom_call.1} parent=11 // pred_check_branch
          %308 = sbr.rel (%p306) target = $region40
        $region39: #{tpu_custom_call.1} parent=11 // pred_region
          %s310 = ssub.s32 2048, 2048
          %311 = vsyncadd [#allocation9], %s310
          %s312 = sshll.u32 [#allocation10], 4
          %s313 = int_to_ptr.vmem [resolvable:$true] %s312
          %318 = dma.hbm_to_vmem [thread:$0]  %s7, 2048, %s313, [#allocation9], 128, 128, 8
        $region40: #{tpu_custom_call.1} parent=11 // pred_fallthru
          _
        // Predicated region
        $region41: #{tpu_custom_call.1} parent=11 // pred_check
          %p319 = pneg %p217
        $region42: #{tpu_custom_call.1} parent=11 // pred_check_branch
          %321 = sbr.rel (%p319) target = $region44
        $region43: #{tpu_custom_call.1} parent=11 // pred_region
          _
        $region44: #{tpu_custom_call.1} parent=11 // pred_fallthru
          _
      $region12: #{tpu_custom_call.1} parent=5 // pred_fallthru
        _
      %p322 = scmp.lt.s32.totalorder %s23, 2
      // Predicated region
      $region45: #{tpu_custom_call.1} parent=5 // pred_check
        %p323 = pneg %p322
      $region46: #{tpu_custom_call.1} parent=5 // pred_check_branch
        %325 = sbr.rel (%p323) target = $region48
      $region47: #{tpu_custom_call.1} parent=5 // pred_region
        // Predicated region
        $region49: #{tpu_custom_call.1} parent=47 // pred_check
          %p326 = pneg %p43
        $region50: #{tpu_custom_call.1} parent=47 // pred_check_branch
          %328 = sbr.rel (%p326) target = $region52
        $region51: #{tpu_custom_call.1} parent=47 // pred_region
          %s329 = sand.u32 %s33, 1
          %s330 = scalar_lea.sflag [#allocation3], %s329
          %s331 = sand.u32 %s33, 1
          %s332 = smul.addr %s331, 128
          %s333 = scalar_lea.vmem [#allocation2], %s332
          %s334 = smul.u32 16, %s23
          %s336 = ssub.s32 2048, 2048
          %337 = vsyncadd %s330, %s336
          %s338 = smul.addr %s334, 128
          %s339 = scalar_lea.hbm %s0, %s338
          %s340 = sshll.u32 %s333, 4
          %s341 = int_to_ptr.vmem [resolvable:$true] %s340
          %346 = dma.hbm_to_vmem [thread:$0]  %s339, 2048, %s341, %s330, 128, 128, 8
        $region52: #{tpu_custom_call.1} parent=47 // pred_fallthru
          _
      $region48: #{tpu_custom_call.1} parent=5 // pred_fallthru
        _
      %p347 = scmp.le.s32.totalorder 1, %s23
      %p348 = scmp.lt.s32.totalorder %s23, 3
      %p349 = pnand %p347, %p348
      %p350 = pneg %p349
      // Predicated region
      $region53: #{tpu_custom_call.1} parent=5 // pred_check
        _
      $region54: #{tpu_custom_call.1} parent=5 // pred_check_branch
        %352 = sbr.rel (%p349) target = $region56
      $region55: #{tpu_custom_call.1} parent=5 // pred_region
        %s353 = ssub.s32 %s23, 1
        %s354 = sand.u32 %s36, 1
        %s355 = scalar_lea.sflag [#allocation3], %s354
        %s356 = sand.u32 %s36, 1
        %s357 = smul.addr %s356, 128
        %s358 = scalar_lea.vmem [#allocation2], %s357
        // Predicated region
        $region57: #{tpu_custom_call.1} parent=55 // pred_check
          %p359 = pneg %p49
        $region58: #{tpu_custom_call.1} parent=55 // pred_check_branch
          %361 = sbr.rel (%p359) target = $region60
        $region59: #{tpu_custom_call.1} parent=55 // pred_region
          %362 = dma.done %s355, 2048
        $region60: #{tpu_custom_call.1} parent=55 // pred_fallthru
          _
        // Predicated region
        $region61: #{tpu_custom_call.1} parent=55 // pred_check
          %p363 = pneg %p70
        $region62: #{tpu_custom_call.1} parent=55 // pred_check_branch
          %365 = sbr.rel (%p363) target = $region64
        $region63: #{tpu_custom_call.1} parent=55 // pred_region
          %366 = dma.done [#allocation6], 2048
        $region64: #{tpu_custom_call.1} parent=55 // pred_fallthru
          _
        // Predicated region
        $region65: #{tpu_custom_call.1} parent=55 // pred_check
          %p367 = pneg %p112
        $region66: #{tpu_custom_call.1} parent=55 // pred_check_branch
          %369 = sbr.rel (%p367) target = $region68
        $region67: #{tpu_custom_call.1} parent=55 // pred_region
          %370 = dma.done [#allocation6], 2048
        $region68: #{tpu_custom_call.1} parent=55 // pred_fallthru
          _
        // Predicated region
        $region69: #{tpu_custom_call.1} parent=55 // pred_check
          %p371 = pneg %p154
        $region70: #{tpu_custom_call.1} parent=55 // pred_check_branch
          %373 = sbr.rel (%p371) target = $region72
        $region71: #{tpu_custom_call.1} parent=55 // pred_region
          %374 = dma.done [#allocation9], 2048
        $region72: #{tpu_custom_call.1} parent=55 // pred_fallthru
          _
        // Predicated region
        $region73: #{tpu_custom_call.1} parent=55 // pred_check
          %p375 = pneg %p196
        $region74: #{tpu_custom_call.1} parent=55 // pred_check_branch
          %377 = sbr.rel (%p375) target = $region76
        $region75: #{tpu_custom_call.1} parent=55 // pred_region
          %378 = dma.done [#allocation9], 2048
        $region76: #{tpu_custom_call.1} parent=55 // pred_fallthru
          _
        %s379 = sand.u32 %s36, 1
        %s380 = scalar_lea.sflag [#allocation3], %s379
        %s381 = sand.u32 %s36, 1
        %s382 = smul.addr %s381, 128
        %s383 = scalar_lea.vmem [#allocation2], %s382
        %p384 = pneg %p49
        %p385 = pneg %p46
        %p386 = pneg %p70
        %p387 = pneg %p67
        %p388 = pneg %p91
        %p389 = pneg %p88
        %p390 = pneg %p112
        %p391 = pneg %p109
        %p392 = pneg %p133
        %p393 = pneg %p130
        %p394 = pneg %p154
        %p395 = pneg %p151
        %p396 = pneg %p175
        %p397 = pneg %p172
        %p398 = pneg %p196
        %p399 = pneg %p193
        %p400 = pneg %p217
        %p401 = pneg %p214
        %p402 = pneg %p243
        %p403 = pneg %p240
        %s404 = sand.u32 %s230, 1
        %s405 = scalar_lea.sflag [#allocation4], %s404
        %s406 = sand.u32 %s230, 1
        %s407 = smul.addr %s406, 128
        %s408 = scalar_lea.vmem [#allocation11], %s407
        %s409 = smul.u32 16, %s28
        %s410 = smul.u32 16, %s28
        %v411 = vld [vmem:[%s358] sm:$0xff]
        %v412 = vld [vmem:[%s358 + $0x8] sm:$0xff]
        %v413 = vld [vmem:[%s358 + $0x10] sm:$0xff]
        %v414 = vld [vmem:[%s358 + $0x18] sm:$0xff]
        %v415 = vld [vmem:[%s358 + $0x20] sm:$0xff]
        %v416 = vld [vmem:[%s358 + $0x28] sm:$0xff]
        %v417 = vld [vmem:[%s358 + $0x30] sm:$0xff]
        %v418 = vld [vmem:[%s358 + $0x38] sm:$0xff]
        %v419 = vld [vmem:[%s358 + $0x40] sm:$0xff]
        %v420 = vld [vmem:[%s358 + $0x48] sm:$0xff]
        %v421 = vld [vmem:[%s358 + $0x50] sm:$0xff]
        %v422 = vld [vmem:[%s358 + $0x58] sm:$0xff]
        %v423 = vld [vmem:[%s358 + $0x60] sm:$0xff]
        %v424 = vld [vmem:[%s358 + $0x68] sm:$0xff]
        %v425 = vld [vmem:[%s358 + $0x70] sm:$0xff]
        %v426 = vld [vmem:[%s358 + $0x78] sm:$0xff]
        %v427 = vld [vmem:[#allocation5] sm:$0xff]
        %v428 = vld [vmem:[#allocation5 + $0x8] sm:$0xff]
        %v429 = vld [vmem:[#allocation5 + $0x10] sm:$0xff]
        %v430 = vld [vmem:[#allocation5 + $0x18] sm:$0xff]
        %v431 = vld [vmem:[#allocation5 + $0x20] sm:$0xff]
        %v432 = vld [vmem:[#allocation5 + $0x28] sm:$0xff]
        %v433 = vld [vmem:[#allocation5 + $0x30] sm:$0xff]
        %v434 = vld [vmem:[#allocation5 + $0x38] sm:$0xff]
        %v435 = vld [vmem:[#allocation5 + $0x40] sm:$0xff]
        %v436 = vld [vmem:[#allocation5 + $0x48] sm:$0xff]
        %v437 = vld [vmem:[#allocation5 + $0x50] sm:$0xff]
        %v438 = vld [vmem:[#allocation5 + $0x58] sm:$0xff]
        %v439 = vld [vmem:[#allocation5 + $0x60] sm:$0xff]
        %v440 = vld [vmem:[#allocation5 + $0x68] sm:$0xff]
        %v441 = vld [vmem:[#allocation5 + $0x70] sm:$0xff]
        %v442 = vld [vmem:[#allocation5 + $0x78] sm:$0xff]
        %v443 = vld [vmem:[%s2] sm:$0x1]
        %v445 = vlaneseq
        %v446 = vshrl.u32 %v445, 7
        %v447 = vsub.s32 0, %v446
        %v448 = vrot.slane %v443, %v447
        %450 = vmatprep.subr.mxu0 0.0
        %451 = vmatpush1.msra.mxu0 %v442
        %452 = vmatprep.subr.mxu0 0.0
        %453 = vmatpush1.msra.mxu0 %v441
        %454 = vmatprep.subr.mxu0 0.0
        %455 = vmatpush1.msra.mxu0 %v440
        %456 = vmatprep.subr.mxu0 0.0
        %457 = vmatpush1.msra.mxu0 %v439
        %458 = vmatprep.subr.mxu0 0.0
        %459 = vmatpush1.msra.mxu0 %v438
        %460 = vmatprep.subr.mxu0 0.0
        %461 = vmatpush1.msra.mxu0 %v437
        %462 = vmatprep.subr.mxu0 0.0
        %463 = vmatpush1.msra.mxu0 %v436
        %464 = vmatprep.subr.mxu0 0.0
        %465 = vmatpush1.msra.mxu0 %v435
        %466 = vmatprep.subr.mxu0 0.0
        %467 = vmatpush1.msra.mxu0 %v434
        %468 = vmatprep.subr.mxu0 0.0
        %469 = vmatpush1.msra.mxu0 %v433
        %470 = vmatprep.subr.mxu0 0.0
        %471 = vmatpush1.msra.mxu0 %v432
        %472 = vmatprep.subr.mxu0 0.0
        %473 = vmatpush1.msra.mxu0 %v431
        %474 = vmatprep.subr.mxu0 0.0
        %475 = vmatpush1.msra.mxu0 %v430
        %476 = vmatprep.subr.mxu0 0.0
        %477 = vmatpush1.msra.mxu0 %v429
        %478 = vmatprep.subr.mxu0 0.0
        %479 = vmatpush1.msra.mxu0 %v428
        %480 = vmatprep.subr.mxu0 0.0
        %481 = vmatpush1.msra.mxu0 %v427
        %482 = vmatprep.subr.mxu0 0.0
        %483 = vmatpush2.msra.mxu0 0.0
        %484 = vmatprep.subr.mxu0 0.0
        %485 = vmatpush2.msra.mxu0 0.0
        %486 = vmatprep.subr.mxu0 0.0
        %487 = vmatpush2.msra.mxu0 0.0
        %488 = vmatprep.subr.mxu0 0.0
        %489 = vmatpush2.msra.mxu0 0.0
        %490 = vmatprep.subr.mxu0 0.0
        %491 = vmatpush2.msra.mxu0 0.0
        %492 = vmatprep.subr.mxu0 0.0
        %493 = vmatpush2.msra.mxu0 0.0
        %494 = vmatprep.subr.mxu0 0.0
        %495 = vmatpush2.msra.mxu0 0.0
        %496 = vmatprep.subr.mxu0 0.0
        %497 = vmatpush2.msra.mxu0 0.0
        %498 = vmatprep.subr.mxu0 0.0
        %499 = vmatpush2.msra.mxu0 0.0
        %500 = vmatprep.subr.mxu0 0.0
        %501 = vmatpush2.msra.mxu0 0.0
        %502 = vmatprep.subr.mxu0 0.0
        %503 = vmatpush2.msra.mxu0 0.0
        %504 = vmatprep.subr.mxu0 0.0
        %505 = vmatpush2.msra.mxu0 0.0
        %506 = vmatprep.subr.mxu0 0.0
        %507 = vmatpush2.msra.mxu0 0.0
        %508 = vmatprep.subr.mxu0 0.0
        %509 = vmatpush2.msra.mxu0 0.0
        %510 = vmatprep.subr.mxu0 0.0
        %511 = vmatpush2.msra.mxu0 0.0
        %512 = vmatprep.subr.mxu0 0.0
        %513 = vmatpush2.msra.mxu0 0.0
        %514 = vmatprep.mubr.f32.mxu0 0.0
        %515 = vmatmul.mubr.f32.gmra.mxu0 %v411
        %v516 = vpop.f32.mrf.mxu0
        %v517 = vadd.f32 %v448, %v516
        %v518 = vpop.f32.mrf.mxu0
        %519 = vmatprep.mubr.f32.mxu0 0.0
        %520 = vmatmul.mubr.f32.gmra.mxu0 %v412
        %v521 = vpop.f32.mrf.mxu0
        %v522 = vadd.f32 %v448, %v521
        %v523 = vpop.f32.mrf.mxu0
        %524 = vmatprep.mubr.f32.mxu0 0.0
        %525 = vmatmul.mubr.f32.gmra.mxu0 %v413
        %v526 = vpop.f32.mrf.mxu0
        %v527 = vadd.f32 %v448, %v526
        %v528 = vpop.f32.mrf.mxu0
        %529 = vmatprep.mubr.f32.mxu0 0.0
        %530 = vmatmul.mubr.f32.gmra.mxu0 %v414
        %v531 = vpop.f32.mrf.mxu0
        %v532 = vadd.f32 %v448, %v531
        %v533 = vpop.f32.mrf.mxu0
        %534 = vmatprep.mubr.f32.mxu0 0.0
        %535 = vmatmul.mubr.f32.gmra.mxu0 %v415
        %v536 = vpop.f32.mrf.mxu0
        %v537 = vadd.f32 %v448, %v536
        %v538 = vpop.f32.mrf.mxu0
        %539 = vmatprep.mubr.f32.mxu0 0.0
        %540 = vmatmul.mubr.f32.gmra.mxu0 %v416
        %v541 = vpop.f32.mrf.mxu0
        %v542 = vadd.f32 %v448, %v541
        %v543 = vpop.f32.mrf.mxu0
        %544 = vmatprep.mubr.f32.mxu0 0.0
        %545 = vmatmul.mubr.f32.gmra.mxu0 %v417
        %v546 = vpop.f32.mrf.mxu0
        %v547 = vadd.f32 %v448, %v546
        %v548 = vpop.f32.mrf.mxu0
        %549 = vmatprep.mubr.f32.mxu0 0.0
        %550 = vmatmul.mubr.f32.gmra.mxu0 %v418
        %v551 = vpop.f32.mrf.mxu0
        %v552 = vadd.f32 %v448, %v551
        %v553 = vpop.f32.mrf.mxu0
        %554 = vmatprep.mubr.f32.mxu0 0.0
        %555 = vmatmul.mubr.f32.gmra.mxu0 %v419
        %v556 = vpop.f32.mrf.mxu0
        %v557 = vadd.f32 %v448, %v556
        %v558 = vpop.f32.mrf.mxu0
        %559 = vmatprep.mubr.f32.mxu0 0.0
        %560 = vmatmul.mubr.f32.gmra.mxu0 %v420
        %v561 = vpop.f32.mrf.mxu0
        %v562 = vadd.f32 %v448, %v561
        %v563 = vpop.f32.mrf.mxu0
        %564 = vmatprep.mubr.f32.mxu0 0.0
        %565 = vmatmul.mubr.f32.gmra.mxu0 %v421
        %v566 = vpop.f32.mrf.mxu0
        %v567 = vadd.f32 %v448, %v566
        %v568 = vpop.f32.mrf.mxu0
        %569 = vmatprep.mubr.f32.mxu0 0.0
        %570 = vmatmul.mubr.f32.gmra.mxu0 %v422
        %v571 = vpop.f32.mrf.mxu0
        %v572 = vadd.f32 %v448, %v571
        %v573 = vpop.f32.mrf.mxu0
        %574 = vmatprep.mubr.f32.mxu0 0.0
        %575 = vmatmul.mubr.f32.gmra.mxu0 %v423
        %v576 = vpop.f32.mrf.mxu0
        %v577 = vadd.f32 %v448, %v576
        %v578 = vpop.f32.mrf.mxu0
        %579 = vmatprep.mubr.f32.mxu0 0.0
        %580 = vmatmul.mubr.f32.gmra.mxu0 %v424
        %v581 = vpop.f32.mrf.mxu0
        %v582 = vadd.f32 %v448, %v581
        %v583 = vpop.f32.mrf.mxu0
        %584 = vmatprep.mubr.f32.mxu0 0.0
        %585 = vmatmul.mubr.f32.gmra.mxu0 %v425
        %v586 = vpop.f32.mrf.mxu0
        %v587 = vadd.f32 %v448, %v586
        %v588 = vpop.f32.mrf.mxu0
        %589 = vmatprep.mubr.f32.mxu0 0.0
        %590 = vmatmul.mubr.f32.gmra.mxu0 %v426
        %v591 = vpop.f32.mrf.mxu0
        %v592 = vadd.f32 %v448, %v591
        %v593 = vpop.f32.mrf.mxu0
        %594 = vdwg.mxu0
        %v595 = vmul.f32 %v517, 0.5
        %v596 = vmul.f32 %v522, 0.5
        %v597 = vmul.f32 %v527, 0.5
        %v598 = vmul.f32 %v532, 0.5
        %v599 = vmul.f32 %v537, 0.5
        %v600 = vmul.f32 %v542, 0.5
        %v601 = vmul.f32 %v547, 0.5
        %v602 = vmul.f32 %v552, 0.5
        %v603 = vmul.f32 %v557, 0.5
        %v604 = vmul.f32 %v562, 0.5
        %v605 = vmul.f32 %v567, 0.5
        %v606 = vmul.f32 %v572, 0.5
        %v607 = vmul.f32 %v577, 0.5
        %v608 = vmul.f32 %v582, 0.5
        %v609 = vmul.f32 %v587, 0.5
        %v610 = vmul.f32 %v592, 0.5
        %v611 = vtanh.pop %v595
        %v612 = vtanh.pop %v596
        %v613 = vtanh.pop %v597
        %v614 = vtanh.pop %v598
        %v615 = vtanh.pop %v599
        %v616 = vtanh.pop %v600
        %v617 = vtanh.pop %v601
        %v618 = vtanh.pop %v602
        %v619 = vtanh.pop %v603
        %v620 = vtanh.pop %v604
        %v621 = vtanh.pop %v605
        %v622 = vtanh.pop %v606
        %v623 = vtanh.pop %v607
        %v624 = vtanh.pop %v608
        %v625 = vtanh.pop %v609
        %v626 = vtanh.pop %v610
        %v627 = vadd.f32 %v611, 1.0
        %v628 = vadd.f32 %v612, 1.0
        %v629 = vadd.f32 %v613, 1.0
        %v630 = vadd.f32 %v614, 1.0
        %v631 = vadd.f32 %v615, 1.0
        %v632 = vadd.f32 %v616, 1.0
        %v633 = vadd.f32 %v617, 1.0
        %v634 = vadd.f32 %v618, 1.0
        %v635 = vadd.f32 %v619, 1.0
        %v636 = vadd.f32 %v620, 1.0
        %v637 = vadd.f32 %v621, 1.0
        %v638 = vadd.f32 %v622, 1.0
        %v639 = vadd.f32 %v623, 1.0
        %v640 = vadd.f32 %v624, 1.0
        %v641 = vadd.f32 %v625, 1.0
        %v642 = vadd.f32 %v626, 1.0
        %v643 = vmul.f32 %v627, 0.5
        %v644 = vmul.f32 %v628, 0.5
        %v645 = vmul.f32 %v629, 0.5
        %v646 = vmul.f32 %v630, 0.5
        %v647 = vmul.f32 %v631, 0.5
        %v648 = vmul.f32 %v632, 0.5
        %v649 = vmul.f32 %v633, 0.5
        %v650 = vmul.f32 %v634, 0.5
        %v651 = vmul.f32 %v635, 0.5
        %v652 = vmul.f32 %v636, 0.5
        %v653 = vmul.f32 %v637, 0.5
        %v654 = vmul.f32 %v638, 0.5
        %v655 = vmul.f32 %v639, 0.5
        %v656 = vmul.f32 %v640, 0.5
        %v657 = vmul.f32 %v641, 0.5
        %v658 = vmul.f32 %v642, 0.5
        %v659 = vld [vmem:[#allocation7] sm:$0xff]
        %v660 = vld [vmem:[#allocation7 + $0x8] sm:$0xff]
        %v661 = vld [vmem:[#allocation7 + $0x10] sm:$0xff]
        %v662 = vld [vmem:[#allocation7 + $0x18] sm:$0xff]
        %v663 = vld [vmem:[#allocation7 + $0x20] sm:$0xff]
        %v664 = vld [vmem:[#allocation7 + $0x28] sm:$0xff]
        %v665 = vld [vmem:[#allocation7 + $0x30] sm:$0xff]
        %v666 = vld [vmem:[#allocation7 + $0x38] sm:$0xff]
        %v667 = vld [vmem:[#allocation7 + $0x40] sm:$0xff]
        %v668 = vld [vmem:[#allocation7 + $0x48] sm:$0xff]
        %v669 = vld [vmem:[#allocation7 + $0x50] sm:$0xff]
        %v670 = vld [vmem:[#allocation7 + $0x58] sm:$0xff]
        %v671 = vld [vmem:[#allocation7 + $0x60] sm:$0xff]
        %v672 = vld [vmem:[#allocation7 + $0x68] sm:$0xff]
        %v673 = vld [vmem:[#allocation7 + $0x70] sm:$0xff]
        %v674 = vld [vmem:[#allocation7 + $0x78] sm:$0xff]
        %v675 = vld [vmem:[%s4] sm:$0x1]
        %v677 = vlaneseq
        %v678 = vshrl.u32 %v677, 7
        %v679 = vsub.s32 0, %v678
        %v680 = vrot.slane %v675, %v679
        %682 = vmatprep.subr.mxu0 0.0
        %683 = vmatpush1.msra.mxu0 %v674
        %684 = vmatprep.subr.mxu0 0.0
        %685 = vmatpush1.msra.mxu0 %v673
        %686 = vmatprep.subr.mxu0 0.0
        %687 = vmatpush1.msra.mxu0 %v672
        %688 = vmatprep.subr.mxu0 0.0
        %689 = vmatpush1.msra.mxu0 %v671
        %690 = vmatprep.subr.mxu0 0.0
        %691 = vmatpush1.msra.mxu0 %v670
        %692 = vmatprep.subr.mxu0 0.0
        %693 = vmatpush1.msra.mxu0 %v669
        %694 = vmatprep.subr.mxu0 0.0
        %695 = vmatpush1.msra.mxu0 %v668
        %696 = vmatprep.subr.mxu0 0.0
        %697 = vmatpush1.msra.mxu0 %v667
        %698 = vmatprep.subr.mxu0 0.0
        %699 = vmatpush1.msra.mxu0 %v666
        %700 = vmatprep.subr.mxu0 0.0
        %701 = vmatpush1.msra.mxu0 %v665
        %702 = vmatprep.subr.mxu0 0.0
        %703 = vmatpush1.msra.mxu0 %v664
        %704 = vmatprep.subr.mxu0 0.0
        %705 = vmatpush1.msra.mxu0 %v663
        %706 = vmatprep.subr.mxu0 0.0
        %707 = vmatpush1.msra.mxu0 %v662
        %708 = vmatprep.subr.mxu0 0.0
        %709 = vmatpush1.msra.mxu0 %v661
        %710 = vmatprep.subr.mxu0 0.0
        %711 = vmatpush1.msra.mxu0 %v660
        %712 = vmatprep.subr.mxu0 0.0
        %713 = vmatpush1.msra.mxu0 %v659
        %714 = vmatprep.subr.mxu0 0.0
        %715 = vmatpush2.msra.mxu0 0.0
        %716 = vmatprep.subr.mxu0 0.0
        %717 = vmatpush2.msra.mxu0 0.0
        %718 = vmatprep.subr.mxu0 0.0
        %719 = vmatpush2.msra.mxu0 0.0
        %720 = vmatprep.subr.mxu0 0.0
        %721 = vmatpush2.msra.mxu0 0.0
        %722 = vmatprep.subr.mxu0 0.0
        %723 = vmatpush2.msra.mxu0 0.0
        %724 = vmatprep.subr.mxu0 0.0
        %725 = vmatpush2.msra.mxu0 0.0
        %726 = vmatprep.subr.mxu0 0.0
        %727 = vmatpush2.msra.mxu0 0.0
        %728 = vmatprep.subr.mxu0 0.0
        %729 = vmatpush2.msra.mxu0 0.0
        %730 = vmatprep.subr.mxu0 0.0
        %731 = vmatpush2.msra.mxu0 0.0
        %732 = vmatprep.subr.mxu0 0.0
        %733 = vmatpush2.msra.mxu0 0.0
        %734 = vmatprep.subr.mxu0 0.0
        %735 = vmatpush2.msra.mxu0 0.0
        %736 = vmatprep.subr.mxu0 0.0
        %737 = vmatpush2.msra.mxu0 0.0
        %738 = vmatprep.subr.mxu0 0.0
        %739 = vmatpush2.msra.mxu0 0.0
        %740 = vmatprep.subr.mxu0 0.0
        %741 = vmatpush2.msra.mxu0 0.0
        %742 = vmatprep.subr.mxu0 0.0
        %743 = vmatpush2.msra.mxu0 0.0
        %744 = vmatprep.subr.mxu0 0.0
        %745 = vmatpush2.msra.mxu0 0.0
        %746 = vmatprep.mubr.f32.mxu0 0.0
        %747 = vmatmul.mubr.f32.gmra.mxu0 %v643
        %v748 = vpop.f32.mrf.mxu0
        %v749 = vadd.f32 %v680, %v748
        %v750 = vpop.f32.mrf.mxu0
        %751 = vmatprep.mubr.f32.mxu0 0.0
        %752 = vmatmul.mubr.f32.gmra.mxu0 %v644
        %v753 = vpop.f32.mrf.mxu0
        %v754 = vadd.f32 %v680, %v753
        %v755 = vpop.f32.mrf.mxu0
        %756 = vmatprep.mubr.f32.mxu0 0.0
        %757 = vmatmul.mubr.f32.gmra.mxu0 %v645
        %v758 = vpop.f32.mrf.mxu0
        %v759 = vadd.f32 %v680, %v758
        %v760 = vpop.f32.mrf.mxu0
        %761 = vmatprep.mubr.f32.mxu0 0.0
        %762 = vmatmul.mubr.f32.gmra.mxu0 %v646
        %v763 = vpop.f32.mrf.mxu0
        %v764 = vadd.f32 %v680, %v763
        %v765 = vpop.f32.mrf.mxu0
        %766 = vmatprep.mubr.f32.mxu0 0.0
        %767 = vmatmul.mubr.f32.gmra.mxu0 %v647
        %v768 = vpop.f32.mrf.mxu0
        %v769 = vadd.f32 %v680, %v768
        %v770 = vpop.f32.mrf.mxu0
        %771 = vmatprep.mubr.f32.mxu0 0.0
        %772 = vmatmul.mubr.f32.gmra.mxu0 %v648
        %v773 = vpop.f32.mrf.mxu0
        %v774 = vadd.f32 %v680, %v773
        %v775 = vpop.f32.mrf.mxu0
        %776 = vmatprep.mubr.f32.mxu0 0.0
        %777 = vmatmul.mubr.f32.gmra.mxu0 %v649
        %v778 = vpop.f32.mrf.mxu0
        %v779 = vadd.f32 %v680, %v778
        %v780 = vpop.f32.mrf.mxu0
        %781 = vmatprep.mubr.f32.mxu0 0.0
        %782 = vmatmul.mubr.f32.gmra.mxu0 %v650
        %v783 = vpop.f32.mrf.mxu0
        %v784 = vadd.f32 %v680, %v783
        %v785 = vpop.f32.mrf.mxu0
        %786 = vmatprep.mubr.f32.mxu0 0.0
        %787 = vmatmul.mubr.f32.gmra.mxu0 %v651
        %v788 = vpop.f32.mrf.mxu0
        %v789 = vadd.f32 %v680, %v788
        %v790 = vpop.f32.mrf.mxu0
        %791 = vmatprep.mubr.f32.mxu0 0.0
        %792 = vmatmul.mubr.f32.gmra.mxu0 %v652
        %v793 = vpop.f32.mrf.mxu0
        %v794 = vadd.f32 %v680, %v793
        %v795 = vpop.f32.mrf.mxu0
        %796 = vmatprep.mubr.f32.mxu0 0.0
        %797 = vmatmul.mubr.f32.gmra.mxu0 %v653
        %v798 = vpop.f32.mrf.mxu0
        %v799 = vadd.f32 %v680, %v798
        %v800 = vpop.f32.mrf.mxu0
        %801 = vmatprep.mubr.f32.mxu0 0.0
        %802 = vmatmul.mubr.f32.gmra.mxu0 %v654
        %v803 = vpop.f32.mrf.mxu0
        %v804 = vadd.f32 %v680, %v803
        %v805 = vpop.f32.mrf.mxu0
        %806 = vmatprep.mubr.f32.mxu0 0.0
        %807 = vmatmul.mubr.f32.gmra.mxu0 %v655
        %v808 = vpop.f32.mrf.mxu0
        %v809 = vadd.f32 %v680, %v808
        %v810 = vpop.f32.mrf.mxu0
        %811 = vmatprep.mubr.f32.mxu0 0.0
        %812 = vmatmul.mubr.f32.gmra.mxu0 %v656
        %v813 = vpop.f32.mrf.mxu0
        %v814 = vadd.f32 %v680, %v813
        %v815 = vpop.f32.mrf.mxu0
        %816 = vmatprep.mubr.f32.mxu0 0.0
        %817 = vmatmul.mubr.f32.gmra.mxu0 %v657
        %v818 = vpop.f32.mrf.mxu0
        %v819 = vadd.f32 %v680, %v818
        %v820 = vpop.f32.mrf.mxu0
        %821 = vmatprep.mubr.f32.mxu0 0.0
        %822 = vmatmul.mubr.f32.gmra.mxu0 %v658
        %v823 = vpop.f32.mrf.mxu0
        %v824 = vadd.f32 %v680, %v823
        %v825 = vpop.f32.mrf.mxu0
        %826 = vdwg.mxu0
        %v827 = vmul.f32 %v749, 0.5
        %v828 = vmul.f32 %v754, 0.5
        %v829 = vmul.f32 %v759, 0.5
        %v830 = vmul.f32 %v764, 0.5
        %v831 = vmul.f32 %v769, 0.5
        %v832 = vmul.f32 %v774, 0.5
        %v833 = vmul.f32 %v779, 0.5
        %v834 = vmul.f32 %v784, 0.5
        %v835 = vmul.f32 %v789, 0.5
        %v836 = vmul.f32 %v794, 0.5
        %v837 = vmul.f32 %v799, 0.5
        %v838 = vmul.f32 %v804, 0.5
        %v839 = vmul.f32 %v809, 0.5
        %v840 = vmul.f32 %v814, 0.5
        %v841 = vmul.f32 %v819, 0.5
        %v842 = vmul.f32 %v824, 0.5
        %v843 = vtanh.pop %v827
        %v844 = vtanh.pop %v828
        %v845 = vtanh.pop %v829
        %v846 = vtanh.pop %v830
        %v847 = vtanh.pop %v831
        %v848 = vtanh.pop %v832
        %v849 = vtanh.pop %v833
        %v850 = vtanh.pop %v834
        %v851 = vtanh.pop %v835
        %v852 = vtanh.pop %v836
        %v853 = vtanh.pop %v837
        %v854 = vtanh.pop %v838
        %v855 = vtanh.pop %v839
        %v856 = vtanh.pop %v840
        %v857 = vtanh.pop %v841
        %v858 = vtanh.pop %v842
        %v859 = vadd.f32 %v843, 1.0
        %v860 = vadd.f32 %v844, 1.0
        %v861 = vadd.f32 %v845, 1.0
        %v862 = vadd.f32 %v846, 1.0
        %v863 = vadd.f32 %v847, 1.0
        %v864 = vadd.f32 %v848, 1.0
        %v865 = vadd.f32 %v849, 1.0
        %v866 = vadd.f32 %v850, 1.0
        %v867 = vadd.f32 %v851, 1.0
        %v868 = vadd.f32 %v852, 1.0
        %v869 = vadd.f32 %v853, 1.0
        %v870 = vadd.f32 %v854, 1.0
        %v871 = vadd.f32 %v855, 1.0
        %v872 = vadd.f32 %v856, 1.0
        %v873 = vadd.f32 %v857, 1.0
        %v874 = vadd.f32 %v858, 1.0
        %v875 = vmul.f32 %v859, 0.5
        %v876 = vmul.f32 %v860, 0.5
        %v877 = vmul.f32 %v861, 0.5
        %v878 = vmul.f32 %v862, 0.5
        %v879 = vmul.f32 %v863, 0.5
        %v880 = vmul.f32 %v864, 0.5
        %v881 = vmul.f32 %v865, 0.5
        %v882 = vmul.f32 %v866, 0.5
        %v883 = vmul.f32 %v867, 0.5
        %v884 = vmul.f32 %v868, 0.5
        %v885 = vmul.f32 %v869, 0.5
        %v886 = vmul.f32 %v870, 0.5
        %v887 = vmul.f32 %v871, 0.5
        %v888 = vmul.f32 %v872, 0.5
        %v889 = vmul.f32 %v873, 0.5
        %v890 = vmul.f32 %v874, 0.5
        %v891 = vld [vmem:[#allocation8] sm:$0xff]
        %v892 = vld [vmem:[#allocation8 + $0x8] sm:$0xff]
        %v893 = vld [vmem:[#allocation8 + $0x10] sm:$0xff]
        %v894 = vld [vmem:[#allocation8 + $0x18] sm:$0xff]
        %v895 = vld [vmem:[#allocation8 + $0x20] sm:$0xff]
        %v896 = vld [vmem:[#allocation8 + $0x28] sm:$0xff]
        %v897 = vld [vmem:[#allocation8 + $0x30] sm:$0xff]
        %v898 = vld [vmem:[#allocation8 + $0x38] sm:$0xff]
        %v899 = vld [vmem:[#allocation8 + $0x40] sm:$0xff]
        %v900 = vld [vmem:[#allocation8 + $0x48] sm:$0xff]
        %v901 = vld [vmem:[#allocation8 + $0x50] sm:$0xff]
        %v902 = vld [vmem:[#allocation8 + $0x58] sm:$0xff]
        %v903 = vld [vmem:[#allocation8 + $0x60] sm:$0xff]
        %v904 = vld [vmem:[#allocation8 + $0x68] sm:$0xff]
        %v905 = vld [vmem:[#allocation8 + $0x70] sm:$0xff]
        %v906 = vld [vmem:[#allocation8 + $0x78] sm:$0xff]
        %v907 = vld [vmem:[%s6] sm:$0x1]
        %v909 = vlaneseq
        %v910 = vshrl.u32 %v909, 7
        %v911 = vsub.s32 0, %v910
        %v912 = vrot.slane %v907, %v911
        %914 = vmatprep.subr.mxu0 0.0
        %915 = vmatpush1.msra.mxu0 %v906
        %916 = vmatprep.subr.mxu0 0.0
        %917 = vmatpush1.msra.mxu0 %v905
        %918 = vmatprep.subr.mxu0 0.0
        %919 = vmatpush1.msra.mxu0 %v904
        %920 = vmatprep.subr.mxu0 0.0
        %921 = vmatpush1.msra.mxu0 %v903
        %922 = vmatprep.subr.mxu0 0.0
        %923 = vmatpush1.msra.mxu0 %v902
        %924 = vmatprep.subr.mxu0 0.0
        %925 = vmatpush1.msra.mxu0 %v901
        %926 = vmatprep.subr.mxu0 0.0
        %927 = vmatpush1.msra.mxu0 %v900
        %928 = vmatprep.subr.mxu0 0.0
        %929 = vmatpush1.msra.mxu0 %v899
        %930 = vmatprep.subr.mxu0 0.0
        %931 = vmatpush1.msra.mxu0 %v898
        %932 = vmatprep.subr.mxu0 0.0
        %933 = vmatpush1.msra.mxu0 %v897
        %934 = vmatprep.subr.mxu0 0.0
        %935 = vmatpush1.msra.mxu0 %v896
        %936 = vmatprep.subr.mxu0 0.0
        %937 = vmatpush1.msra.mxu0 %v895
        %938 = vmatprep.subr.mxu0 0.0
        %939 = vmatpush1.msra.mxu0 %v894
        %940 = vmatprep.subr.mxu0 0.0
        %941 = vmatpush1.msra.mxu0 %v893
        %942 = vmatprep.subr.mxu0 0.0
        %943 = vmatpush1.msra.mxu0 %v892
        %944 = vmatprep.subr.mxu0 0.0
        %945 = vmatpush1.msra.mxu0 %v891
        %946 = vmatprep.subr.mxu0 0.0
        %947 = vmatpush2.msra.mxu0 0.0
        %948 = vmatprep.subr.mxu0 0.0
        %949 = vmatpush2.msra.mxu0 0.0
        %950 = vmatprep.subr.mxu0 0.0
        %951 = vmatpush2.msra.mxu0 0.0
        %952 = vmatprep.subr.mxu0 0.0
        %953 = vmatpush2.msra.mxu0 0.0
        %954 = vmatprep.subr.mxu0 0.0
        %955 = vmatpush2.msra.mxu0 0.0
        %956 = vmatprep.subr.mxu0 0.0
        %957 = vmatpush2.msra.mxu0 0.0
        %958 = vmatprep.subr.mxu0 0.0
        %959 = vmatpush2.msra.mxu0 0.0
        %960 = vmatprep.subr.mxu0 0.0
        %961 = vmatpush2.msra.mxu0 0.0
        %962 = vmatprep.subr.mxu0 0.0
        %963 = vmatpush2.msra.mxu0 0.0
        %964 = vmatprep.subr.mxu0 0.0
        %965 = vmatpush2.msra.mxu0 0.0
        %966 = vmatprep.subr.mxu0 0.0
        %967 = vmatpush2.msra.mxu0 0.0
        %968 = vmatprep.subr.mxu0 0.0
        %969 = vmatpush2.msra.mxu0 0.0
        %970 = vmatprep.subr.mxu0 0.0
        %971 = vmatpush2.msra.mxu0 0.0
        %972 = vmatprep.subr.mxu0 0.0
        %973 = vmatpush2.msra.mxu0 0.0
        %974 = vmatprep.subr.mxu0 0.0
        %975 = vmatpush2.msra.mxu0 0.0
        %976 = vmatprep.subr.mxu0 0.0
        %977 = vmatpush2.msra.mxu0 0.0
        %978 = vmatprep.mubr.f32.mxu0 0.0
        %979 = vmatmul.mubr.f32.gmra.mxu0 %v875
        %v980 = vpop.f32.mrf.mxu0
        %v981 = vadd.f32 %v912, %v980
        %v982 = vpop.f32.mrf.mxu0
        %983 = vmatprep.mubr.f32.mxu0 0.0
        %984 = vmatmul.mubr.f32.gmra.mxu0 %v876
        %v985 = vpop.f32.mrf.mxu0
        %v986 = vadd.f32 %v912, %v985
        %v987 = vpop.f32.mrf.mxu0
        %988 = vmatprep.mubr.f32.mxu0 0.0
        %989 = vmatmul.mubr.f32.gmra.mxu0 %v877
        %v990 = vpop.f32.mrf.mxu0
        %v991 = vadd.f32 %v912, %v990
        %v992 = vpop.f32.mrf.mxu0
        %993 = vmatprep.mubr.f32.mxu0 0.0
        %994 = vmatmul.mubr.f32.gmra.mxu0 %v878
        %v995 = vpop.f32.mrf.mxu0
        %v996 = vadd.f32 %v912, %v995
        %v997 = vpop.f32.mrf.mxu0
        %998 = vmatprep.mubr.f32.mxu0 0.0
        %999 = vmatmul.mubr.f32.gmra.mxu0 %v879
        %v1000 = vpop.f32.mrf.mxu0
        %v1001 = vadd.f32 %v912, %v1000
        %v1002 = vpop.f32.mrf.mxu0
        %1003 = vmatprep.mubr.f32.mxu0 0.0
        %1004 = vmatmul.mubr.f32.gmra.mxu0 %v880
        %v1005 = vpop.f32.mrf.mxu0
        %v1006 = vadd.f32 %v912, %v1005
        %v1007 = vpop.f32.mrf.mxu0
        %1008 = vmatprep.mubr.f32.mxu0 0.0
        %1009 = vmatmul.mubr.f32.gmra.mxu0 %v881
        %v1010 = vpop.f32.mrf.mxu0
        %v1011 = vadd.f32 %v912, %v1010
        %v1012 = vpop.f32.mrf.mxu0
        %1013 = vmatprep.mubr.f32.mxu0 0.0
        %1014 = vmatmul.mubr.f32.gmra.mxu0 %v882
        %v1015 = vpop.f32.mrf.mxu0
        %v1016 = vadd.f32 %v912, %v1015
        %v1017 = vpop.f32.mrf.mxu0
        %1018 = vmatprep.mubr.f32.mxu0 0.0
        %1019 = vmatmul.mubr.f32.gmra.mxu0 %v883
        %v1020 = vpop.f32.mrf.mxu0
        %v1021 = vadd.f32 %v912, %v1020
        %v1022 = vpop.f32.mrf.mxu0
        %1023 = vmatprep.mubr.f32.mxu0 0.0
        %1024 = vmatmul.mubr.f32.gmra.mxu0 %v884
        %v1025 = vpop.f32.mrf.mxu0
        %v1026 = vadd.f32 %v912, %v1025
        %v1027 = vpop.f32.mrf.mxu0
        %1028 = vmatprep.mubr.f32.mxu0 0.0
        %1029 = vmatmul.mubr.f32.gmra.mxu0 %v885
        %v1030 = vpop.f32.mrf.mxu0
        %v1031 = vadd.f32 %v912, %v1030
        %v1032 = vpop.f32.mrf.mxu0
        %1033 = vmatprep.mubr.f32.mxu0 0.0
        %1034 = vmatmul.mubr.f32.gmra.mxu0 %v886
        %v1035 = vpop.f32.mrf.mxu0
        %v1036 = vadd.f32 %v912, %v1035
        %v1037 = vpop.f32.mrf.mxu0
        %1038 = vmatprep.mubr.f32.mxu0 0.0
        %1039 = vmatmul.mubr.f32.gmra.mxu0 %v887
        %v1040 = vpop.f32.mrf.mxu0
        %v1041 = vadd.f32 %v912, %v1040
        %v1042 = vpop.f32.mrf.mxu0
        %1043 = vmatprep.mubr.f32.mxu0 0.0
        %1044 = vmatmul.mubr.f32.gmra.mxu0 %v888
        %v1045 = vpop.f32.mrf.mxu0
        %v1046 = vadd.f32 %v912, %v1045
        %v1047 = vpop.f32.mrf.mxu0
        %1048 = vmatprep.mubr.f32.mxu0 0.0
        %1049 = vmatmul.mubr.f32.gmra.mxu0 %v889
        %v1050 = vpop.f32.mrf.mxu0
        %v1051 = vadd.f32 %v912, %v1050
        %v1052 = vpop.f32.mrf.mxu0
        %1053 = vmatprep.mubr.f32.mxu0 0.0
        %1054 = vmatmul.mubr.f32.gmra.mxu0 %v890
        %v1055 = vpop.f32.mrf.mxu0
        %v1056 = vadd.f32 %v912, %v1055
        %v1057 = vpop.f32.mrf.mxu0
        %1058 = vdwg.mxu0
        %v1059 = vmul.f32 %v981, 0.5
        %v1060 = vmul.f32 %v986, 0.5
        %v1061 = vmul.f32 %v991, 0.5
        %v1062 = vmul.f32 %v996, 0.5
        %v1063 = vmul.f32 %v1001, 0.5
        %v1064 = vmul.f32 %v1006, 0.5
        %v1065 = vmul.f32 %v1011, 0.5
        %v1066 = vmul.f32 %v1016, 0.5
        %v1067 = vmul.f32 %v1021, 0.5
        %v1068 = vmul.f32 %v1026, 0.5
        %v1069 = vmul.f32 %v1031, 0.5
        %v1070 = vmul.f32 %v1036, 0.5
        %v1071 = vmul.f32 %v1041, 0.5
        %v1072 = vmul.f32 %v1046, 0.5
        %v1073 = vmul.f32 %v1051, 0.5
        %v1074 = vmul.f32 %v1056, 0.5
        %v1075 = vtanh.pop %v1059
        %v1076 = vtanh.pop %v1060
        %v1077 = vtanh.pop %v1061
        %v1078 = vtanh.pop %v1062
        %v1079 = vtanh.pop %v1063
        %v1080 = vtanh.pop %v1064
        %v1081 = vtanh.pop %v1065
        %v1082 = vtanh.pop %v1066
        %v1083 = vtanh.pop %v1067
        %v1084 = vtanh.pop %v1068
        %v1085 = vtanh.pop %v1069
        %v1086 = vtanh.pop %v1070
        %v1087 = vtanh.pop %v1071
        %v1088 = vtanh.pop %v1072
        %v1089 = vtanh.pop %v1073
        %v1090 = vtanh.pop %v1074
        %v1091 = vadd.f32 %v1075, 1.0
        %v1092 = vadd.f32 %v1076, 1.0
        %v1093 = vadd.f32 %v1077, 1.0
        %v1094 = vadd.f32 %v1078, 1.0
        %v1095 = vadd.f32 %v1079, 1.0
        %v1096 = vadd.f32 %v1080, 1.0
        %v1097 = vadd.f32 %v1081, 1.0
        %v1098 = vadd.f32 %v1082, 1.0
        %v1099 = vadd.f32 %v1083, 1.0
        %v1100 = vadd.f32 %v1084, 1.0
        %v1101 = vadd.f32 %v1085, 1.0
        %v1102 = vadd.f32 %v1086, 1.0
        %v1103 = vadd.f32 %v1087, 1.0
        %v1104 = vadd.f32 %v1088, 1.0
        %v1105 = vadd.f32 %v1089, 1.0
        %v1106 = vadd.f32 %v1090, 1.0
        %v1107 = vmul.f32 %v1091, 0.5
        %v1108 = vmul.f32 %v1092, 0.5
        %v1109 = vmul.f32 %v1093, 0.5
        %v1110 = vmul.f32 %v1094, 0.5
        %v1111 = vmul.f32 %v1095, 0.5
        %v1112 = vmul.f32 %v1096, 0.5
        %v1113 = vmul.f32 %v1097, 0.5
        %v1114 = vmul.f32 %v1098, 0.5
        %v1115 = vmul.f32 %v1099, 0.5
        %v1116 = vmul.f32 %v1100, 0.5
        %v1117 = vmul.f32 %v1101, 0.5
        %v1118 = vmul.f32 %v1102, 0.5
        %v1119 = vmul.f32 %v1103, 0.5
        %v1120 = vmul.f32 %v1104, 0.5
        %v1121 = vmul.f32 %v1105, 0.5
        %v1122 = vmul.f32 %v1106, 0.5
        %v1123 = vld [vmem:[#allocation10] sm:$0xff]
        %v1124 = vld [vmem:[#allocation10 + $0x8] sm:$0xff]
        %v1125 = vld [vmem:[#allocation10 + $0x10] sm:$0xff]
        %v1126 = vld [vmem:[#allocation10 + $0x18] sm:$0xff]
        %v1127 = vld [vmem:[#allocation10 + $0x20] sm:$0xff]
        %v1128 = vld [vmem:[#allocation10 + $0x28] sm:$0xff]
        %v1129 = vld [vmem:[#allocation10 + $0x30] sm:$0xff]
        %v1130 = vld [vmem:[#allocation10 + $0x38] sm:$0xff]
        %v1131 = vld [vmem:[#allocation10 + $0x40] sm:$0xff]
        %v1132 = vld [vmem:[#allocation10 + $0x48] sm:$0xff]
        %v1133 = vld [vmem:[#allocation10 + $0x50] sm:$0xff]
        %v1134 = vld [vmem:[#allocation10 + $0x58] sm:$0xff]
        %v1135 = vld [vmem:[#allocation10 + $0x60] sm:$0xff]
        %v1136 = vld [vmem:[#allocation10 + $0x68] sm:$0xff]
        %v1137 = vld [vmem:[#allocation10 + $0x70] sm:$0xff]
        %v1138 = vld [vmem:[#allocation10 + $0x78] sm:$0xff]
        %v1139 = vld [vmem:[%s8] sm:$0x1]
        %v1141 = vlaneseq
        %v1142 = vshrl.u32 %v1141, 7
        %v1143 = vsub.s32 0, %v1142
        %v1144 = vrot.slane %v1139, %v1143
        %1146 = vmatprep.subr.mxu0 0.0
        %1147 = vmatpush1.msra.mxu0 %v1138
        %1148 = vmatprep.subr.mxu0 0.0
        %1149 = vmatpush1.msra.mxu0 %v1137
        %1150 = vmatprep.subr.mxu0 0.0
        %1151 = vmatpush1.msra.mxu0 %v1136
        %1152 = vmatprep.subr.mxu0 0.0
        %1153 = vmatpush1.msra.mxu0 %v1135
        %1154 = vmatprep.subr.mxu0 0.0
        %1155 = vmatpush1.msra.mxu0 %v1134
        %1156 = vmatprep.subr.mxu0 0.0
        %1157 = vmatpush1.msra.mxu0 %v1133
        %1158 = vmatprep.subr.mxu0 0.0
        %1159 = vmatpush1.msra.mxu0 %v1132
        %1160 = vmatprep.subr.mxu0 0.0
        %1161 = vmatpush1.msra.mxu0 %v1131
        %1162 = vmatprep.subr.mxu0 0.0
        %1163 = vmatpush1.msra.mxu0 %v1130
        %1164 = vmatprep.subr.mxu0 0.0
        %1165 = vmatpush1.msra.mxu0 %v1129
        %1166 = vmatprep.subr.mxu0 0.0
        %1167 = vmatpush1.msra.mxu0 %v1128
        %1168 = vmatprep.subr.mxu0 0.0
        %1169 = vmatpush1.msra.mxu0 %v1127
        %1170 = vmatprep.subr.mxu0 0.0
        %1171 = vmatpush1.msra.mxu0 %v1126
        %1172 = vmatprep.subr.mxu0 0.0
        %1173 = vmatpush1.msra.mxu0 %v1125
        %1174 = vmatprep.subr.mxu0 0.0
        %1175 = vmatpush1.msra.mxu0 %v1124
        %1176 = vmatprep.subr.mxu0 0.0
        %1177 = vmatpush1.msra.mxu0 %v1123
        %1178 = vmatprep.subr.mxu0 0.0
        %1179 = vmatpush2.msra.mxu0 0.0
        %1180 = vmatprep.subr.mxu0 0.0
        %1181 = vmatpush2.msra.mxu0 0.0
        %1182 = vmatprep.subr.mxu0 0.0
        %1183 = vmatpush2.msra.mxu0 0.0
        %1184 = vmatprep.subr.mxu0 0.0
        %1185 = vmatpush2.msra.mxu0 0.0
        %1186 = vmatprep.subr.mxu0 0.0
        %1187 = vmatpush2.msra.mxu0 0.0
        %1188 = vmatprep.subr.mxu0 0.0
        %1189 = vmatpush2.msra.mxu0 0.0
        %1190 = vmatprep.subr.mxu0 0.0
        %1191 = vmatpush2.msra.mxu0 0.0
        %1192 = vmatprep.subr.mxu0 0.0
        %1193 = vmatpush2.msra.mxu0 0.0
        %1194 = vmatprep.subr.mxu0 0.0
        %1195 = vmatpush2.msra.mxu0 0.0
        %1196 = vmatprep.subr.mxu0 0.0
        %1197 = vmatpush2.msra.mxu0 0.0
        %1198 = vmatprep.subr.mxu0 0.0
        %1199 = vmatpush2.msra.mxu0 0.0
        %1200 = vmatprep.subr.mxu0 0.0
        %1201 = vmatpush2.msra.mxu0 0.0
        %1202 = vmatprep.subr.mxu0 0.0
        %1203 = vmatpush2.msra.mxu0 0.0
        %1204 = vmatprep.subr.mxu0 0.0
        %1205 = vmatpush2.msra.mxu0 0.0
        %1206 = vmatprep.subr.mxu0 0.0
        %1207 = vmatpush2.msra.mxu0 0.0
        %1208 = vmatprep.subr.mxu0 0.0
        %1209 = vmatpush2.msra.mxu0 0.0
        %1210 = vmatprep.mubr.f32.mxu0 0.0
        %1211 = vmatmul.mubr.f32.gmra.mxu0 %v1107
        %v1212 = vpop.f32.mrf.mxu0
        %v1213 = vadd.f32 %v1144, %v1212
        %v1214 = vpop.f32.mrf.mxu0
        %1215 = vmatprep.mubr.f32.mxu0 0.0
        %1216 = vmatmul.mubr.f32.gmra.mxu0 %v1108
        %v1217 = vpop.f32.mrf.mxu0
        %v1218 = vadd.f32 %v1144, %v1217
        %v1219 = vpop.f32.mrf.mxu0
        %1220 = vmatprep.mubr.f32.mxu0 0.0
        %1221 = vmatmul.mubr.f32.gmra.mxu0 %v1109
        %v1222 = vpop.f32.mrf.mxu0
        %v1223 = vadd.f32 %v1144, %v1222
        %v1224 = vpop.f32.mrf.mxu0
        %1225 = vmatprep.mubr.f32.mxu0 0.0
        %1226 = vmatmul.mubr.f32.gmra.mxu0 %v1110
        %v1227 = vpop.f32.mrf.mxu0
        %v1228 = vadd.f32 %v1144, %v1227
        %v1229 = vpop.f32.mrf.mxu0
        %1230 = vmatprep.mubr.f32.mxu0 0.0
        %1231 = vmatmul.mubr.f32.gmra.mxu0 %v1111
        %v1232 = vpop.f32.mrf.mxu0
        %v1233 = vadd.f32 %v1144, %v1232
        %v1234 = vpop.f32.mrf.mxu0
        %1235 = vmatprep.mubr.f32.mxu0 0.0
        %1236 = vmatmul.mubr.f32.gmra.mxu0 %v1112
        %v1237 = vpop.f32.mrf.mxu0
        %v1238 = vadd.f32 %v1144, %v1237
        %v1239 = vpop.f32.mrf.mxu0
        %1240 = vmatprep.mubr.f32.mxu0 0.0
        %1241 = vmatmul.mubr.f32.gmra.mxu0 %v1113
        %v1242 = vpop.f32.mrf.mxu0
        %v1243 = vadd.f32 %v1144, %v1242
        %v1244 = vpop.f32.mrf.mxu0
        %1245 = vmatprep.mubr.f32.mxu0 0.0
        %1246 = vmatmul.mubr.f32.gmra.mxu0 %v1114
        %v1247 = vpop.f32.mrf.mxu0
        %v1248 = vadd.f32 %v1144, %v1247
        %v1249 = vpop.f32.mrf.mxu0
        %1250 = vmatprep.mubr.f32.mxu0 0.0
        %1251 = vmatmul.mubr.f32.gmra.mxu0 %v1115
        %v1252 = vpop.f32.mrf.mxu0
        %v1253 = vadd.f32 %v1144, %v1252
        %v1254 = vpop.f32.mrf.mxu0
        %1255 = vmatprep.mubr.f32.mxu0 0.0
        %1256 = vmatmul.mubr.f32.gmra.mxu0 %v1116
        %v1257 = vpop.f32.mrf.mxu0
        %v1258 = vadd.f32 %v1144, %v1257
        %v1259 = vpop.f32.mrf.mxu0
        %1260 = vmatprep.mubr.f32.mxu0 0.0
        %1261 = vmatmul.mubr.f32.gmra.mxu0 %v1117
        %v1262 = vpop.f32.mrf.mxu0
        %v1263 = vadd.f32 %v1144, %v1262
        %v1264 = vpop.f32.mrf.mxu0
        %1265 = vmatprep.mubr.f32.mxu0 0.0
        %1266 = vmatmul.mubr.f32.gmra.mxu0 %v1118
        %v1267 = vpop.f32.mrf.mxu0
        %v1268 = vadd.f32 %v1144, %v1267
        %v1269 = vpop.f32.mrf.mxu0
        %1270 = vmatprep.mubr.f32.mxu0 0.0
        %1271 = vmatmul.mubr.f32.gmra.mxu0 %v1119
        %v1272 = vpop.f32.mrf.mxu0
        %v1273 = vadd.f32 %v1144, %v1272
        %v1274 = vpop.f32.mrf.mxu0
        %1275 = vmatprep.mubr.f32.mxu0 0.0
        %1276 = vmatmul.mubr.f32.gmra.mxu0 %v1120
        %v1277 = vpop.f32.mrf.mxu0
        %v1278 = vadd.f32 %v1144, %v1277
        %v1279 = vpop.f32.mrf.mxu0
        %1280 = vmatprep.mubr.f32.mxu0 0.0
        %1281 = vmatmul.mubr.f32.gmra.mxu0 %v1121
        %v1282 = vpop.f32.mrf.mxu0
        %v1283 = vadd.f32 %v1144, %v1282
        %v1284 = vpop.f32.mrf.mxu0
        %1285 = vmatprep.mubr.f32.mxu0 0.0
        %1286 = vmatmul.mubr.f32.gmra.mxu0 %v1122
        %v1287 = vpop.f32.mrf.mxu0
        %v1288 = vadd.f32 %v1144, %v1287
        %v1289 = vpop.f32.mrf.mxu0
        %1290 = vdwg.mxu0
        %v1291 = vmul.f32 %v1213, 0.5
        %v1292 = vmul.f32 %v1218, 0.5
        %v1293 = vmul.f32 %v1223, 0.5
        %v1294 = vmul.f32 %v1228, 0.5
        %v1295 = vmul.f32 %v1233, 0.5
        %v1296 = vmul.f32 %v1238, 0.5
        %v1297 = vmul.f32 %v1243, 0.5
        %v1298 = vmul.f32 %v1248, 0.5
        %v1299 = vmul.f32 %v1253, 0.5
        %v1300 = vmul.f32 %v1258, 0.5
        %v1301 = vmul.f32 %v1263, 0.5
        %v1302 = vmul.f32 %v1268, 0.5
        %v1303 = vmul.f32 %v1273, 0.5
        %v1304 = vmul.f32 %v1278, 0.5
        %v1305 = vmul.f32 %v1283, 0.5
        %v1306 = vmul.f32 %v1288, 0.5
        %v1307 = vtanh.pop %v1291
        %v1308 = vtanh.pop %v1292
        %v1309 = vtanh.pop %v1293
        %v1310 = vtanh.pop %v1294
        %v1311 = vtanh.pop %v1295
        %v1312 = vtanh.pop %v1296
        %v1313 = vtanh.pop %v1297
        %v1314 = vtanh.pop %v1298
        %v1315 = vtanh.pop %v1299
        %v1316 = vtanh.pop %v1300
        %v1317 = vtanh.pop %v1301
        %v1318 = vtanh.pop %v1302
        %v1319 = vtanh.pop %v1303
        %v1320 = vtanh.pop %v1304
        %v1321 = vtanh.pop %v1305
        %v1322 = vtanh.pop %v1306
        %v1323 = vadd.f32 %v1307, 1.0
        %v1324 = vadd.f32 %v1308, 1.0
        %v1325 = vadd.f32 %v1309, 1.0
        %v1326 = vadd.f32 %v1310, 1.0
        %v1327 = vadd.f32 %v1311, 1.0
        %v1328 = vadd.f32 %v1312, 1.0
        %v1329 = vadd.f32 %v1313, 1.0
        %v1330 = vadd.f32 %v1314, 1.0
        %v1331 = vadd.f32 %v1315, 1.0
        %v1332 = vadd.f32 %v1316, 1.0
        %v1333 = vadd.f32 %v1317, 1.0
        %v1334 = vadd.f32 %v1318, 1.0
        %v1335 = vadd.f32 %v1319, 1.0
        %v1336 = vadd.f32 %v1320, 1.0
        %v1337 = vadd.f32 %v1321, 1.0
        %v1338 = vadd.f32 %v1322, 1.0
        %v1339 = vmul.f32 %v1323, 0.5
        %v1340 = vmul.f32 %v1324, 0.5
        %v1341 = vmul.f32 %v1325, 0.5
        %v1342 = vmul.f32 %v1326, 0.5
        %v1343 = vmul.f32 %v1327, 0.5
        %v1344 = vmul.f32 %v1328, 0.5
        %v1345 = vmul.f32 %v1329, 0.5
        %v1346 = vmul.f32 %v1330, 0.5
        %v1347 = vmul.f32 %v1331, 0.5
        %v1348 = vmul.f32 %v1332, 0.5
        %v1349 = vmul.f32 %v1333, 0.5
        %v1350 = vmul.f32 %v1334, 0.5
        %v1351 = vmul.f32 %v1335, 0.5
        %v1352 = vmul.f32 %v1336, 0.5
        %v1353 = vmul.f32 %v1337, 0.5
        %v1354 = vmul.f32 %v1338, 0.5
        %1355 = vst [vmem:[%s408] sm:$0xff] %v1339
        %1356 = vst [vmem:[%s408 + $0x8] sm:$0xff] %v1340
        %1357 = vst [vmem:[%s408 + $0x10] sm:$0xff] %v1341
        %1358 = vst [vmem:[%s408 + $0x18] sm:$0xff] %v1342
        %1359 = vst [vmem:[%s408 + $0x20] sm:$0xff] %v1343
        %1360 = vst [vmem:[%s408 + $0x28] sm:$0xff] %v1344
        %1361 = vst [vmem:[%s408 + $0x30] sm:$0xff] %v1345
        %1362 = vst [vmem:[%s408 + $0x38] sm:$0xff] %v1346
        %1363 = vst [vmem:[%s408 + $0x40] sm:$0xff] %v1347
        %1364 = vst [vmem:[%s408 + $0x48] sm:$0xff] %v1348
        %1365 = vst [vmem:[%s408 + $0x50] sm:$0xff] %v1349
        %1366 = vst [vmem:[%s408 + $0x58] sm:$0xff] %v1350
        %1367 = vst [vmem:[%s408 + $0x60] sm:$0xff] %v1351
        %1368 = vst [vmem:[%s408 + $0x68] sm:$0xff] %v1352
        %1369 = vst [vmem:[%s408 + $0x70] sm:$0xff] %v1353
        %1370 = vst [vmem:[%s408 + $0x78] sm:$0xff] %v1354
        %s1371 = sand.u32 %s230, 1
        %s1372 = scalar_lea.sflag [#allocation4], %s1371
        %s1373 = sand.u32 %s230, 1
        %s1374 = smul.addr %s1373, 128
        %s1375 = scalar_lea.vmem [#allocation11], %s1374
        // Predicated region
        $region77: #{tpu_custom_call.1} parent=55 // pred_check
          %p1376 = pneg %p240
        $region78: #{tpu_custom_call.1} parent=55 // pred_check_branch
          %1378 = sbr.rel (%p1376) target = $region80
        $region79: #{tpu_custom_call.1} parent=55 // pred_region
          %s1379 = smul.u32 16, %s28
          %s1381 = ssub.s32 2048, 2048
          %1382 = vsyncadd %s1372, %s1381
          %s1383 = smul.addr %s1379, 128
          %s1384 = scalar_lea.hbm %s9, %s1383
          %s1385 = sshll.u32 %s1375, 4
          %s1386 = int_to_ptr.vmem [resolvable:$true] %s1385
          %1391 = dma.vmem_to_hbm [thread:$0]  %s1386, 2048, %s1384, %s1372, 128, 128, 8
        $region80: #{tpu_custom_call.1} parent=55 // pred_fallthru
          _
      $region56: #{tpu_custom_call.1} parent=5 // pred_fallthru
        _
      %p1392 = scmp.le.s32.totalorder 2, %s23
      // Predicated region
      $region81: #{tpu_custom_call.1} parent=5 // pred_check
        %p1393 = pneg %p1392
      $region82: #{tpu_custom_call.1} parent=5 // pred_check_branch
        %1395 = sbr.rel (%p1393) target = $region84
      $region83: #{tpu_custom_call.1} parent=5 // pred_region
        %s1396 = ssub.s32 %s23, 2
        // Predicated region
        $region85: #{tpu_custom_call.1} parent=83 // pred_check
          %p1397 = pneg %p246
        $region86: #{tpu_custom_call.1} parent=83 // pred_check_branch
          %1399 = sbr.rel (%p1397) target = $region88
        $region87: #{tpu_custom_call.1} parent=83 // pred_region
          %s1400 = sand.u32 %s231, 1
          %s1401 = scalar_lea.sflag [#allocation4], %s1400
          %s1402 = sand.u32 %s231, 1
          %s1403 = smul.addr %s1402, 128
          %s1404 = scalar_lea.vmem [#allocation11], %s1403
          %1405 = dma.done %s1401, 2048
        $region88: #{tpu_custom_call.1} parent=83 // pred_fallthru
          _
      $region84: #{tpu_custom_call.1} parent=5 // pred_fallthru
        _
    $region6: #{tpu_custom_call.1} parent=1 // loop_footer
      %s27 = sadd.s32 1, %s23
    $region7: #{tpu_custom_call.1} parent=1 // loop_footer_branch
      %22 = sbr.rel target = $region3
    $region8: #{tpu_custom_call.1} parent=1 // loop_exit
      _
    %1406 = vsyncpa [#allocation3], 1
    %s1407 = scalar_lea.sflag [#allocation3], 1
    %1408 = vsyncpa %s1407, 1
    %1409 = vsyncpa [#allocation6], 1
    %1410 = vsyncpa [#allocation9], 1
    %1411 = vsyncpa [#allocation4], 1
    %s1412 = scalar_lea.sflag [#allocation4], 1
    %1413 = vsyncpa %s1412, 1

</llo_original>
